<compile_context>
chip_gen: v5e
topology: v5e:2x2
jax: 0.10.0
libtpu: 0.0.40
codegen_flags: <defaults>
</compile_context>

<pallas_src>
import functools
import math

import jax
import jax.numpy as jnp
from jax.experimental import pallas as pl
from jax.experimental.pallas import tpu as pltpu


# ---- compile-time constants (match the torch module defaults) ---------------
MAX_RES = 15.0
MIN_RES = 15.0 / 2000.0
DIV_FACTOR = 4
N_FREQ = int(math.log(MAX_RES / MIN_RES, DIV_FACTOR)) + 1          # = 6
FREQS = tuple(2.0 * math.pi * (float(DIV_FACTOR) ** k) / MAX_RES   # len 6
              for k in range(N_FREQ))
OUT_DIM = 2 * N_FREQ                                               # = 12

_LANES = 128
_SUBLANES = 8


def _sinusoids_kernel(x_ref, out_ref):
    # x_ref:   (tile_r, 128)          VMEM, fully lane/sublane dense
    # out_ref: (2F, tile_r, 128)      VMEM; out_ref[j]   = sin(freq_j * xs)
    #                                       out_ref[F+j] = cos(freq_j * xs)
    xs = jnp.sqrt(x_ref[...] + 1e-8)            # dense sqrt
    for j, f in enumerate(FREQS):               # short, fully unrolled (F = 6)
        emb = xs * f                            # scalar * vreg (VPU)
        out_ref[j] = jnp.sin(emb).astype(out_ref.dtype)
        out_ref[N_FREQ + j] = jnp.cos(emb).astype(out_ref.dtype)
    # TODO(synk): on v7x only, if profiling shows the VPU binds, replace
    # features 1..5 with the double-angle recurrence (2 transcendentals/row).


def _choose_tiling(n, max_rows_per_block):
    """Pick (tile_r, r_total, blocks) for mapping N rows onto (r_total, 128)."""
    r_needed = pl.cdiv(max(n, 1), _LANES)
    # Split into >=2 blocks when there is enough work so both v7x TCs run.
    min_blocks = 2 if r_needed >= 2 * _SUBLANES else 1
    blocks = max(min_blocks, pl.cdiv(r_needed, max_rows_per_block))
    if blocks == 1:
        tile_r = r_needed                         # full-extent block (any size)
    else:
        tile_r = pl.cdiv(r_needed, blocks)
        tile_r = ((tile_r + _SUBLANES - 1) // _SUBLANES) * _SUBLANES
        blocks = pl.cdiv(r_needed, tile_r)
    r_total = tile_r * blocks
    return tile_r, r_total, blocks


def _slab_call(x2, tile_r, r_total, blocks, out_dtype):
    n_pad = r_total * _LANES
    cost = pl.CostEstimate(
        flops=3 * OUT_DIM * n_pad,
        transcendentals=(OUT_DIM + 1) * n_pad,
        bytes_accessed=n_pad * (4 + OUT_DIM * jnp.dtype(out_dtype).itemsize),
    )
    return pl.pallas_call(
        _sinusoids_kernel,
        out_shape=jax.ShapeDtypeStruct((OUT_DIM, r_total, _LANES), out_dtype),
        grid_spec=pltpu.PrefetchScalarGridSpec(
            num_scalar_prefetch=0,
            grid=(blocks,),
            in_specs=[pl.BlockSpec((tile_r, _LANES), lambda i: (i, 0))],
            out_specs=pl.BlockSpec((OUT_DIM, tile_r, _LANES),
                                   lambda i: (0, i, 0)),
        ),
        compiler_params=pltpu.CompilerParams(
            dimension_semantics=("parallel",),
            vmem_limit_bytes=32 * 1024 * 1024,
        ),
        cost_estimate=cost,
    )(x2)


@functools.partial(jax.jit, static_argnames=("max_rows_per_block", "out_dtype"))
def sinusoids_embedding_slab(x, *, max_rows_per_block=1024,
                             out_dtype=jnp.float32):
    """Lane-dense form: (2F, Npad). Row j = sin(f_j*sqrt(x+eps)), row F+j = cos.

    Columns >= N are padding.  This is the layout downstream Pallas/XLA
    consumers should read (or fuse) to avoid an extra HBM transpose pass.
    """
    n = x.shape[0]
    x_flat = x.reshape(-1).astype(jnp.float32)                  # (N,)
    tile_r, r_total, blocks = _choose_tiling(n, max_rows_per_block)
    npad = r_total * _LANES
    if npad != n:                                               # only ragged N pays
        x_flat = jnp.pad(x_flat, (0, npad - n))                 # sqrt(1e-8) on pad ok
    x2 = x_flat.reshape(r_total, _LANES)
    slab3 = _slab_call(x2, tile_r, r_total, blocks, out_dtype)
    return slab3.reshape(OUT_DIM, npad)                         # free reshape


@functools.partial(jax.jit, static_argnames=("max_rows_per_block", "out_dtype"))
def sinusoids_embedding(x, *, max_rows_per_block=1024, out_dtype=jnp.float32):
    """x: (N, 1) float32 -> (N, 2*N_FREQ), matching the torch module exactly."""
    n = x.shape[0]
    slab = sinusoids_embedding_slab(x, max_rows_per_block=max_rows_per_block,
                                    out_dtype=out_dtype)
    # TODO(synk): this transpose re-reads/re-writes the embedding once through
    # HBM; prefer consuming `sinusoids_embedding_slab` (or fusing this relayout
    # into the consumer kernel) in real pipelines.
    return slab.T[:n]                                           # (N, 2F)


def reference(x, frequencies):
    xs = jnp.sqrt(x + 1e-8)                       # (N, 1)
    emb = xs * frequencies[None, :]               # (N, F)
    return jnp.concatenate((jnp.sin(emb), jnp.cos(emb)), axis=-1)


if __name__ == "__main__":
    freqs = jnp.asarray(FREQS, dtype=jnp.float32)
    key = jax.random.PRNGKey(0)

    # Two small cases: a multiple of 128 (multi-block grid) and a ragged N
    # (exercises pad + slice and the single full-extent block path).
    for n in (2048, 77):
        key, sub = jax.random.split(key)
        x = jax.random.uniform(sub, (n, 1), dtype=jnp.float32,
                               minval=0.0, maxval=4.0)

        out = jax.block_until_ready(sinusoids_embedding(x))
        ref = reference(x, freqs)

        assert out.shape == (n, OUT_DIM), (out.shape, (n, OUT_DIM))
        assert out.dtype == jnp.float32
        assert jnp.allclose(out, ref, atol=1e-5, rtol=1e-5), \
            f"mismatch vs reference (N={n})"

    # Optional reduced-precision output path (halves HBM write traffic).
    out_bf16 = jax.block_until_ready(
        sinusoids_embedding(x, out_dtype=jnp.bfloat16))
    assert out_bf16.dtype == jnp.bfloat16
    assert jnp.allclose(out_bf16.astype(jnp.float32), ref,
                        atol=1e-2, rtol=1e-2), "bf16 path mismatch"

    print("KERNEL_OK")
</pallas_src>

<mosaic_0001>
module attributes {stable_mosaic.version = 11 : i64} {
  func.func @_sinusoids_kernel(%arg0: i32, %arg1: memref<8x128xf32, #tpu.memory_space<vmem>>, %arg2: memref<12x8x128xf32, #tpu.memory_space<vmem>>) attributes {dimension_semantics = [#tpu.dimension_semantics<parallel>], iteration_bounds = array<i64: 2>, scalar_prefetch = 0 : i64, scratch_operands = 0 : i64, tpu.core_type = #tpu.core_type<tc>, window_params = [{transform_indices = @transform_0, window_bounds = array<i64: 8, 128>}, {transform_indices = @transform_1, window_bounds = array<i64: 12, 8, 128>}]} {
    %c0 = arith.constant 0 : index
    %c0_0 = arith.constant 0 : index
    %0 = vector.load %arg1[%c0, %c0_0] : memref<8x128xf32, #tpu.memory_space<vmem>>, vector<8x128xf32>
    %cst = arith.constant 9.99999993E-9 : f32
    %1 = vector.broadcast %cst : f32 to vector<8x128xf32>
    %2 = arith.addf %0, %1 : vector<8x128xf32>
    %3 = math.sqrt %2 : vector<8x128xf32>
    %cst_1 = arith.constant 0.418879032 : f32
    %4 = vector.broadcast %cst_1 : f32 to vector<8x128xf32>
    %5 = arith.mulf %3, %4 : vector<8x128xf32>
    %6 = math.sin %5 : vector<8x128xf32>
    %c0_2 = arith.constant 0 : index
    %c0_3 = arith.constant 0 : index
    %c0_4 = arith.constant 0 : index
    %7 = vector.load %arg2[%c0_2, %c0_3, %c0_4] : memref<12x8x128xf32, #tpu.memory_space<vmem>>, vector<1x8x128xf32>
    %8 = vector.shape_cast %7 : vector<1x8x128xf32> to vector<8x128xf32>
    %9 = vector.shape_cast %6 : vector<8x128xf32> to vector<1x8x128xf32>
    tpu.vector_store %arg2[%c0_2, %c0_3, %c0_4], %9 {strides = array<i32>} : memref<12x8x128xf32, #tpu.memory_space<vmem>>, vector<1x8x128xf32>,
    %10 = math.cos %5 : vector<8x128xf32>
    %c6 = arith.constant 6 : index
    %c0_5 = arith.constant 0 : index
    %c0_6 = arith.constant 0 : index
    %11 = vector.load %arg2[%c6, %c0_5, %c0_6] : memref<12x8x128xf32, #tpu.memory_space<vmem>>, vector<1x8x128xf32>
    %12 = vector.shape_cast %11 : vector<1x8x128xf32> to vector<8x128xf32>
    %13 = vector.shape_cast %10 : vector<8x128xf32> to vector<1x8x128xf32>
    tpu.vector_store %arg2[%c6, %c0_5, %c0_6], %13 {strides = array<i32>} : memref<12x8x128xf32, #tpu.memory_space<vmem>>, vector<1x8x128xf32>,
    %cst_7 = arith.constant 1.67551613 : f32
    %14 = vector.broadcast %cst_7 : f32 to vector<8x128xf32>
    %15 = arith.mulf %3, %14 : vector<8x128xf32>
    %16 = math.sin %15 : vector<8x128xf32>
    %c1 = arith.constant 1 : index
    %c0_8 = arith.constant 0 : index
    %c0_9 = arith.constant 0 : index
    %17 = vector.load %arg2[%c1, %c0_8, %c0_9] : memref<12x8x128xf32, #tpu.memory_space<vmem>>, vector<1x8x128xf32>
    %18 = vector.shape_cast %17 : vector<1x8x128xf32> to vector<8x128xf32>
    %19 = vector.shape_cast %16 : vector<8x128xf32> to vector<1x8x128xf32>
    tpu.vector_store %arg2[%c1, %c0_8, %c0_9], %19 {strides = array<i32>} : memref<12x8x128xf32, #tpu.memory_space<vmem>>, vector<1x8x128xf32>,
    %20 = math.cos %15 : vector<8x128xf32>
    %c7 = arith.constant 7 : index
    %c0_10 = arith.constant 0 : index
    %c0_11 = arith.constant 0 : index
    %21 = vector.load %arg2[%c7, %c0_10, %c0_11] : memref<12x8x128xf32, #tpu.memory_space<vmem>>, vector<1x8x128xf32>
    %22 = vector.shape_cast %21 : vector<1x8x128xf32> to vector<8x128xf32>
    %23 = vector.shape_cast %20 : vector<8x128xf32> to vector<1x8x128xf32>
    tpu.vector_store %arg2[%c7, %c0_10, %c0_11], %23 {strides = array<i32>} : memref<12x8x128xf32, #tpu.memory_space<vmem>>, vector<1x8x128xf32>,
    %cst_12 = arith.constant 6.70206451 : f32
    %24 = vector.broadcast %cst_12 : f32 to vector<8x128xf32>
    %25 = arith.mulf %3, %24 : vector<8x128xf32>
    %26 = math.sin %25 : vector<8x128xf32>
    %c2 = arith.constant 2 : index
    %c0_13 = arith.constant 0 : index
    %c0_14 = arith.constant 0 : index
    %27 = vector.load %arg2[%c2, %c0_13, %c0_14] : memref<12x8x128xf32, #tpu.memory_space<vmem>>, vector<1x8x128xf32>
    %28 = vector.shape_cast %27 : vector<1x8x128xf32> to vector<8x128xf32>
    %29 = vector.shape_cast %26 : vector<8x128xf32> to vector<1x8x128xf32>
    tpu.vector_store %arg2[%c2, %c0_13, %c0_14], %29 {strides = array<i32>} : memref<12x8x128xf32, #tpu.memory_space<vmem>>, vector<1x8x128xf32>,
    %30 = math.cos %25 : vector<8x128xf32>
    %c8 = arith.constant 8 : index
    %c0_15 = arith.constant 0 : index
    %c0_16 = arith.constant 0 : index
    %31 = vector.load %arg2[%c8, %c0_15, %c0_16] : memref<12x8x128xf32, #tpu.memory_space<vmem>>, vector<1x8x128xf32>
    %32 = vector.shape_cast %31 : vector<1x8x128xf32> to vector<8x128xf32>
    %33 = vector.shape_cast %30 : vector<8x128xf32> to vector<1x8x128xf32>
    tpu.vector_store %arg2[%c8, %c0_15, %c0_16], %33 {strides = array<i32>} : memref<12x8x128xf32, #tpu.memory_space<vmem>>, vector<1x8x128xf32>,
    %cst_17 = arith.constant 26.8082581 : f32
    %34 = vector.broadcast %cst_17 : f32 to vector<8x128xf32>
    %35 = arith.mulf %3, %34 : vector<8x128xf32>
    %36 = math.sin %35 : vector<8x128xf32>
    %c3 = arith.constant 3 : index
    %c0_18 = arith.constant 0 : index
    %c0_19 = arith.constant 0 : index
    %37 = vector.load %arg2[%c3, %c0_18, %c0_19] : memref<12x8x128xf32, #tpu.memory_space<vmem>>, vector<1x8x128xf32>
    %38 = vector.shape_cast %37 : vector<1x8x128xf32> to vector<8x128xf32>
    %39 = vector.shape_cast %36 : vector<8x128xf32> to vector<1x8x128xf32>
    tpu.vector_store %arg2[%c3, %c0_18, %c0_19], %39 {strides = array<i32>} : memref<12x8x128xf32, #tpu.memory_space<vmem>>, vector<1x8x128xf32>,
    %40 = math.cos %35 : vector<8x128xf32>
    %c9 = arith.constant 9 : index
    %c0_20 = arith.constant 0 : index
    %c0_21 = arith.constant 0 : index
    %41 = vector.load %arg2[%c9, %c0_20, %c0_21] : memref<12x8x128xf32, #tpu.memory_space<vmem>>, vector<1x8x128xf32>
    %42 = vector.shape_cast %41 : vector<1x8x128xf32> to vector<8x128xf32>
    %43 = vector.shape_cast %40 : vector<8x128xf32> to vector<1x8x128xf32>
    tpu.vector_store %arg2[%c9, %c0_20, %c0_21], %43 {strides = array<i32>} : memref<12x8x128xf32, #tpu.memory_space<vmem>>, vector<1x8x128xf32>,
    %cst_22 = arith.constant 107.233032 : f32
    %44 = vector.broadcast %cst_22 : f32 to vector<8x128xf32>
    %45 = arith.mulf %3, %44 : vector<8x128xf32>
    %46 = math.sin %45 : vector<8x128xf32>
    %c4 = arith.constant 4 : index
    %c0_23 = arith.constant 0 : index
    %c0_24 = arith.constant 0 : index
    %47 = vector.load %arg2[%c4, %c0_23, %c0_24] : memref<12x8x128xf32, #tpu.memory_space<vmem>>, vector<1x8x128xf32>
    %48 = vector.shape_cast %47 : vector<1x8x128xf32> to vector<8x128xf32>
    %49 = vector.shape_cast %46 : vector<8x128xf32> to vector<1x8x128xf32>
    tpu.vector_store %arg2[%c4, %c0_23, %c0_24], %49 {strides = array<i32>} : memref<12x8x128xf32, #tpu.memory_space<vmem>>, vector<1x8x128xf32>,
    %50 = math.cos %45 : vector<8x128xf32>
    %c10 = arith.constant 10 : index
    %c0_25 = arith.constant 0 : index
    %c0_26 = arith.constant 0 : index
    %51 = vector.load %arg2[%c10, %c0_25, %c0_26] : memref<12x8x128xf32, #tpu.memory_space<vmem>>, vector<1x8x128xf32>
    %52 = vector.shape_cast %51 : vector<1x8x128xf32> to vector<8x128xf32>
    %53 = vector.shape_cast %50 : vector<8x128xf32> to vector<1x8x128xf32>
    tpu.vector_store %arg2[%c10, %c0_25, %c0_26], %53 {strides = array<i32>} : memref<12x8x128xf32, #tpu.memory_space<vmem>>, vector<1x8x128xf32>,
    %cst_27 = arith.constant 428.932129 : f32
    %54 = vector.broadcast %cst_27 : f32 to vector<8x128xf32>
    %55 = arith.mulf %3, %54 : vector<8x128xf32>
    %56 = math.sin %55 : vector<8x128xf32>
    %c5 = arith.constant 5 : index
    %c0_28 = arith.constant 0 : index
    %c0_29 = arith.constant 0 : index
    %57 = vector.load %arg2[%c5, %c0_28, %c0_29] : memref<12x8x128xf32, #tpu.memory_space<vmem>>, vector<1x8x128xf32>
    %58 = vector.shape_cast %57 : vector<1x8x128xf32> to vector<8x128xf32>
    %59 = vector.shape_cast %56 : vector<8x128xf32> to vector<1x8x128xf32>
    tpu.vector_store %arg2[%c5, %c0_28, %c0_29], %59 {strides = array<i32>} : memref<12x8x128xf32, #tpu.memory_space<vmem>>, vector<1x8x128xf32>,
    %60 = math.cos %55 : vector<8x128xf32>
    %c11 = arith.constant 11 : index
    %c0_30 = arith.constant 0 : index
    %c0_31 = arith.constant 0 : index
    %61 = vector.load %arg2[%c11, %c0_30, %c0_31] : memref<12x8x128xf32, #tpu.memory_space<vmem>>, vector<1x8x128xf32>
    %62 = vector.shape_cast %61 : vector<1x8x128xf32> to vector<8x128xf32>
    %63 = vector.shape_cast %60 : vector<8x128xf32> to vector<1x8x128xf32>
    tpu.vector_store %arg2[%c11, %c0_30, %c0_31], %63 {strides = array<i32>} : memref<12x8x128xf32, #tpu.memory_space<vmem>>, vector<1x8x128xf32>,
    return
  }
  func.func @transform_0(%arg0: i32) -> (i32, i32) {
    %c0_i32 = arith.constant 0 : i32
    %c0_i32_0 = arith.constant 0 : i32
    return %arg0, %c0_i32 : i32, i32
  }
  func.func @transform_1(%arg0: i32) -> (i32, i32, i32) {
    %c0_i32 = arith.constant 0 : i32
    %c0_i32_0 = arith.constant 0 : i32
    %c0_i32_1 = arith.constant 0 : i32
    return %c0_i32, %arg0, %c0_i32_0 : i32, i32, i32
  }
}

</mosaic_0001>

<llo_original>
// kernel: sinusoids_embedding_slab.1
$region0: #{sinusoids_embedding_slab.1}
  #allocation0 [shape = 'u32[]', space=smem, size = 0x4, offset = 0x4, fixed_abs, tag = 'smem constant byte address 0x4 - core index']
  #allocation1 [shape = 'u32[72,128]{1,0:T(1,128)}', space=vmem, size = 0x9000, scoped, tag = 'internal scratch']
  %s0 = inlined_call_operand.hbm [shape: f32[16,128], index: 0, kind: input, shape index: {}]
  %s1 = inlined_call_operand.vmem [shape: f32[12,16,128], index: 1, kind: output, shape index: {}]
  %s2 = sld [smem:[#allocation0]]
  $region75: #{sinusoids_embedding_slab.1} parent=0
    _
  %s4 = ssub.s32 1, %s2
  %s5 = scalar_select 0, %s4, %s2
  $region1: #{sinusoids_embedding_slab.1} parent=0
    #allocation2 [shape = 'u8[8192]{0}', space=vmem, size = 0x2000, scoped, tag = 'input window, operand 0']
    #allocation3 [shape = 's32[2]{0}', space=sflag, size = 0x8, scoped, tag = 'scoped memory for sinusoids_embedding_slab.1']
    #allocation4 [shape = 'u8[98304]{0}', space=vmem, size = 0x18000, scoped, tag = 'output window, operand 0']
    %6 = vsyncpa [#allocation3], 0
    %s7 = scalar_lea.sflag [#allocation3], 1
    %8 = vsyncpa %s7, 0
    loop: start=0, step=1, limit=4
    $region2: #{sinusoids_embedding_slab.1} parent=1 // loop_pre_header
      _
    $region3: #{sinusoids_embedding_slab.1} parent=1 // loop_header
      %s10 = sphi 0, %s14
      %p11 = scmp.ge.s32.totalorder %s10, 4
      %s20 = sphi 0, %s22
      %s23 = sphi 0, %s20
      %s24 = sphi 0, %s23
      %s40 = sphi 0, %s24
      %s46 = sphi 0, %s48
      %s49 = sphi 0, %s46
      %s50 = sphi 0, %s49
      %s66 = sphi 0, %s50
    $region4: #{sinusoids_embedding_slab.1} parent=1 // loop_header_branch
      %13 = sbr.rel (%p11) target = $region8
    $region5: #{sinusoids_embedding_slab.1} parent=1 // loop_body
      %s15 = ssub.s32 %s10, 1
      %s16 = ssub.s32 %s10, 2
      %s17 = sadd.s32 %s10, 1
      %s18 = ssub.s32 %s10, %s17
      %p19 = scmp.eq.s32.totalorder %s18, 0
      %s21 = sadd.s32 %s20, 1
      %s22 = scalar_select %p19, %s20, %s21
      %p25 = pneg %p19
      %p26 = scmp.eq.s32.totalorder %s10, 1
      %p27 = por %p25, %p26
      %p28 = scmp.ne.s32.totalorder %s20, %s23
      %p29 = scmp.eq.s32.totalorder %s10, 0
      %p30 = por %p28, %p29
      %p31 = scmp.ne.s32.totalorder %s20, %s23
      %p32 = scmp.eq.s32.totalorder %s15, 1
      %p33 = por %p31, %p32
      %p34 = scmp.ne.s32.totalorder %s23, %s24
      %p35 = scmp.eq.s32.totalorder %s15, 0
      %p36 = por %p34, %p35
      %p37 = scmp.ne.s32.totalorder %s23, %s24
      %p38 = scmp.eq.s32.totalorder %s16, 1
      %p39 = por %p37, %p38
      %p41 = scmp.ne.s32.totalorder %s24, %s40
      %p42 = scmp.eq.s32.totalorder %s16, 0
      %p43 = por %p41, %p42
      %s44 = ssub.s32 %s10, %s17
      %p45 = scmp.eq.s32.totalorder %s44, 0
      %s47 = sadd.s32 %s46, 1
      %s48 = scalar_select %p45, %s46, %s47
      %p51 = pneg %p45
      %p52 = scmp.eq.s32.totalorder %s10, 1
      %p53 = por %p51, %p52
      %p54 = scmp.ne.s32.totalorder %s46, %s49
      %p55 = scmp.eq.s32.totalorder %s10, 0
      %p56 = por %p54, %p55
      %p57 = scmp.ne.s32.totalorder %s46, %s49
      %p58 = scmp.eq.s32.totalorder %s15, 1
      %p59 = por %p57, %p58
      %p60 = scmp.ne.s32.totalorder %s49, %s50
      %p61 = scmp.eq.s32.totalorder %s15, 0
      %p62 = por %p60, %p61
      %p63 = scmp.ne.s32.totalorder %s49, %s50
      %p64 = scmp.eq.s32.totalorder %s16, 1
      %p65 = por %p63, %p64
      %p67 = scmp.ne.s32.totalorder %s50, %s66
      %p68 = scmp.eq.s32.totalorder %s16, 0
      %p69 = por %p67, %p68
      %p70 = scmp.le.s32.totalorder 1, %s10
      %p71 = scmp.lt.s32.totalorder %s10, 3
      %p72 = pnand %p70, %p71
      %p73 = pneg %p72
      // Predicated region
      $region9: #{sinusoids_embedding_slab.1} parent=5 // pred_check
        _
      $region10: #{sinusoids_embedding_slab.1} parent=5 // pred_check_branch
        %75 = sbr.rel (%p72) target = $region12
      $region11: #{sinusoids_embedding_slab.1} parent=5 // pred_region
        %s76 = ssub.s32 %s10, 1
      $region12: #{sinusoids_embedding_slab.1} parent=5 // pred_fallthru
        _
      %p77 = scmp.lt.s32.totalorder %s10, 2
      // Predicated region
      $region13: #{sinusoids_embedding_slab.1} parent=5 // pred_check
        %p78 = pneg %p77
      $region14: #{sinusoids_embedding_slab.1} parent=5 // pred_check_branch
        %80 = sbr.rel (%p78) target = $region16
      $region15: #{sinusoids_embedding_slab.1} parent=5 // pred_region
        // Predicated region
        $region17: #{sinusoids_embedding_slab.1} parent=15 // pred_check
          %p81 = pneg %p30
        $region18: #{sinusoids_embedding_slab.1} parent=15 // pred_check_branch
          %83 = sbr.rel (%p81) target = $region20
        $region19: #{sinusoids_embedding_slab.1} parent=15 // pred_region
          %s84 = sand.u32 %s20, 1
          %s85 = scalar_lea.sflag [#allocation3], %s84
          %s86 = sand.u32 %s20, 1
          %s87 = smul.addr %s86, 8
          %s88 = scalar_lea.vmem [#allocation2], %s87
          %90 = vsyncadd %s85, 0
          %s91 = smul.addr %s10, 8
          %s92 = scalar_lea.hbm %s0, %s91
          %s94 = sshll.u32 %s92, 4
          %s95 = int_to_ptr.hbm [resolvable:$true] %s94
          %s96 = sshll.u32 %s88, 4
          %s97 = int_to_ptr.vmem [resolvable:$true] %s96
          %99 = dma.hbm_to_vmem [thread:$0]  %s95, 128, %s97, %s85
        $region20: #{sinusoids_embedding_slab.1} parent=15 // pred_fallthru
          _
      $region16: #{sinusoids_embedding_slab.1} parent=5 // pred_fallthru
        _
      %p100 = scmp.le.s32.totalorder 1, %s10
      %p101 = scmp.lt.s32.totalorder %s10, 3
      %p102 = pnand %p100, %p101
      %p103 = pneg %p102
      // Predicated region
      $region21: #{sinusoids_embedding_slab.1} parent=5 // pred_check
        _
      $region22: #{sinusoids_embedding_slab.1} parent=5 // pred_check_branch
        %105 = sbr.rel (%p102) target = $region24
      $region23: #{sinusoids_embedding_slab.1} parent=5 // pred_region
        %s106 = ssub.s32 %s10, 1
        %s107 = sand.u32 %s23, 1
        %s108 = scalar_lea.sflag [#allocation3], %s107
        %s109 = sand.u32 %s23, 1
        %s110 = smul.addr %s109, 8
        %s111 = scalar_lea.vmem [#allocation2], %s110
        // Predicated region
        $region25: #{sinusoids_embedding_slab.1} parent=23 // pred_check
          %p112 = pneg %p36
        $region26: #{sinusoids_embedding_slab.1} parent=23 // pred_check_branch
          %114 = sbr.rel (%p112) target = $region28
        $region27: #{sinusoids_embedding_slab.1} parent=23 // pred_region
          %116 = dma.done %s108, 128
        $region28: #{sinusoids_embedding_slab.1} parent=23 // pred_fallthru
          _
        %s117 = sand.u32 %s23, 1
        %s118 = scalar_lea.sflag [#allocation3], %s117
        %s119 = sand.u32 %s23, 1
        %s120 = smul.addr %s119, 8
        %s121 = scalar_lea.vmem [#allocation2], %s120
        %p122 = pneg %p36
        %p123 = pneg %p33
        %p124 = pneg %p62
        %p125 = pneg %p59
        %s126 = sand.u32 %s49, 1
        %s127 = sand.u32 %s49, 1
        %s128 = smul.addr %s127, 96
        %s129 = scalar_lea.vmem [#allocation4], %s128
        %v130 = vld [vmem:[%s111] sm:$0xff]
        %v131 = vadd.f32 %v130, 1e-08
        %v132 = vrsqrt.pop %v131
        %v133 = vmul.f32 %v132, %v131
        %v134 = vmul.f32 %v133, %v132
        %v135 = vmul.f32 0.5, %v134
        %v136 = vsub.f32 1.5, %v135
        %v137 = vmul.f32 %v132, %v136
        %v138 = vmul.f32 %v131, %v137
        %vm139 = vcmp.eq.f32.partialorder %v131, inf
        %v140 = vsel %vm139, %v131, %v138
        %vm141 = vcmp.eq.f32.partialorder %v131, 0.0
        %v142 = vand.u32 %v131, 2147483648
        %v143 = vsel %vm141, %v142, %v140
        %v144 = vmul.f32 %v143, 0.41887903
        %v145 = vand.u32 2147483647, %v144
        %vm146 = vcmp.le.f32.partialorder %v145, 0.7853982
        %vm147 = vcmp.lt.s32.totalorder %v144, 0
        %v148 = vand.u32 %v144, 2139095040
        %v149 = vshrl.u32 %v148, 23
        %v150 = vsub.s32 %v149, 127
        %v151 = vand.u32 2147483647, %v144
        %v152 = vand.u32 %v151, 8388607
        %v153 = vor.u32 %v152, 8388608
        %v154 = vsub.s32 0, %v153
        %v155 = vadd.s32 %v150, 1
        %vm156 = vcmp.gt.s32.totalorder %v155, 0
        %v157 = vsel %vm156, %v155, 0
        %v158 = vshrl.u32 %v157, 5
        %v159 = vand.u32 %v157, 31
        %v160 = vsub.s32 32, %v159
        %v161 = vshrl.u32 683565275, %v160
        %v162 = vshll.u32 683565275, %v159
        %v163 = vshrl.u32 2475754826, %v160
        %v164 = vor.u32 %v162, %v163
        %v165 = vshll.u32 2475754826, %v159
        %v166 = vshrl.u32 2131351028, %v160
        %v167 = vor.u32 %v165, %v166
        %v168 = vshll.u32 2131351028, %v159
        %v169 = vshrl.u32 2102212464, %v160
        %v170 = vor.u32 %v168, %v169
        %v171 = vshll.u32 2102212464, %v159
        %v172 = vshrl.u32 920167782, %v160
        %v173 = vor.u32 %v171, %v172
        %v174 = vshll.u32 920167782, %v159
        %v175 = vshrl.u32 1326507024, %v160
        %v176 = vor.u32 %v174, %v175
        %vm177 = vcmp.lt.s32.totalorder %v158, 1
        %vm178 = vcmp.lt.s32.totalorder %v158, 2
        %vm179 = vcmp.lt.s32.totalorder %v158, 3
        %vm180 = vcmp.lt.s32.totalorder %v158, 4
        %v181 = vsel %vm177, %v161, %v164
        %v182 = vsel %vm180, %v170, 2102212464
        %v183 = vsel %vm179, %v167, %v182
        %v184 = vsel %vm178, %v181, %v183
        %v185 = vsel %vm177, %v164, %v167
        %v186 = vsel %vm180, %v173, 920167782
        %v187 = vsel %vm179, %v170, %v186
        %v188 = vsel %vm178, %v185, %v187
        %v189 = vsel %vm177, %v167, %v170
        %v190 = vsel %vm180, %v176, 1326507024
        %v191 = vsel %vm179, %v173, %v190
        %v192 = vsel %vm178, %v189, %v191
        %v193 = vshll.u32 %v153, 8
        %v194 = vand.u32 %v193, 65535
        %v195 = vshrl.u32 %v193, 16
        %v196 = vand.u32 %v192, 65535
        %v197 = vshrl.u32 %v192, 16
        %v198 = vmul.u32 %v194, %v196
        %v199 = vmul.u32 %v194, %v197
        %v200 = vmul.u32 %v195, %v196
        %v201 = vmul.u32 %v195, %v197
        %v202 = vshll.u32 %v199, 16
        %v203 = vshrl.u32 %v199, 16
        %v204 = vshll.u32 %v200, 16
        %v205 = vshrl.u32 %v200, 16
        %vm206 = vc.u32 %v198, %v202
        %v207 = vsel %vm206, 1, 0
        %v208 = vadd.s32 %v198, %v202
        %v209 = vadd.s32 %v201, %v207
        %vm210 = vc.u32 %v208, %v204
        %v211 = vsel %vm210, 1, 0
        %v212 = vadd.s32 %v208, %v204
        %v213 = vadd.s32 %v209, %v211
        %v214 = vadd.s32 %v213, %v203
        %v215 = vadd.s32 %v214, %v205
        %v216 = vand.u32 %v193, 65535
        %v217 = vshrl.u32 %v193, 16
        %v218 = vand.u32 %v188, 65535
        %v219 = vshrl.u32 %v188, 16
        %v220 = vmul.u32 %v216, %v218
        %v221 = vmul.u32 %v216, %v219
        %v222 = vmul.u32 %v217, %v218
        %v223 = vmul.u32 %v217, %v219
        %v224 = vshll.u32 %v221, 16
        %v225 = vshrl.u32 %v221, 16
        %v226 = vshll.u32 %v222, 16
        %v227 = vshrl.u32 %v222, 16
        %vm228 = vc.u32 %v220, %v224
        %v229 = vsel %vm228, 1, 0
        %v230 = vadd.s32 %v220, %v224
        %v231 = vadd.s32 %v223, %v229
        %vm232 = vc.u32 %v230, %v226
        %v233 = vsel %vm232, 1, 0
        %v234 = vadd.s32 %v230, %v226
        %v235 = vadd.s32 %v231, %v233
        %v236 = vadd.s32 %v235, %v225
        %v237 = vadd.s32 %v236, %v227
        %v238 = vmul.u32 %v193, %v184
        %v239 = vadd.s32 %v215, %v234
        %vm240 = vc.u32 %v215, %v234
        %v241 = vadd.s32 %v237, 1
        %v242 = vsel %vm240, %v241, %v237
        %v243 = vadd.s32 %v238, %v242
        %v244 = vadd.s32 %v243, 536870912
        %v245 = vshrl.u32 %v244, 30
        %v246 = vshll.u32 %v245, 30
        %v247 = vsub.s32 %v243, %v246
        %vm248 = vcmp.lt.s32.totalorder %v247, 0
        %v249 = vsub.s32 0, %v247
        %v250 = vsel %vm248, %v249, %v247
        %v251 = vclz %v250
        %v252 = vsub.s32 %v251, 2
        %vm253 = vcmp.gt.s32.totalorder 0, %v252
        %v254 = vsel %vm253, 0, %v252
        %v255 = vsub.s32 32, %v254
        %v256 = vshll.u32 %v247, %v254
        %v257 = vshrl.u32 %v239, %v255
        %v258 = vor.u32 %v256, %v257
        %v259 = vsub.s32 4294967266, %v254
        %v260 = vadd.s32 %v259, 127
        %v261 = vshll.u32 %v260, 23
        %v262 = vor.u32 4788187, %v261
        %v263 = vand.u32 2147483647, %v262
        %v265 = vcvt.s32.f32 %v258
        %v266 = vmul.f32 %v265, %v263
        %v267 = vxor.u32 %v266, 2147483648
        %v268 = vsel %vm147, %v267, %v266
        %v269 = vsub.s32 4, %v245
        %v270 = vsel %vm147, %v269, %v245
        %v271 = vsel %vm146, %v144, %v268
        %v272 = vsel %vm146, 0, %v270
        %v273 = vmul.f32 %v271, %v271
        %v274 = vmul.f32 %v273, -0.001358992
        %v275 = vadd.f32 %v274, 0.041655596
        %v276 = vmul.f32 %v273, %v275
        %v277 = vadd.f32 %v276, -0.4999988
        %v278 = vmul.f32 %v273, %v277
        %v279 = vadd.f32 1.0, %v278
        %v280 = vmul.f32 %v271, %v271
        %v281 = vmul.f32 %v280, -0.00019511016
        %v282 = vadd.f32 %v281, 0.008332121
        %v283 = vmul.f32 %v280, %v282
        %v284 = vadd.f32 %v283, -0.16666654
        %v285 = vmul.f32 %v280, %v284
        %v286 = vadd.f32 %v285, 1.0
        %v287 = vmul.f32 %v286, %v271
        %vm288 = vweird.f32 %v144
        %v289 = vadd.s32 %v272, 3
        %v290 = vand.u32 %v289, 3
        %vm291 = vcmp.lt.s32.totalorder %v290, 2
        %vm292 = vcmp.eq.s32.totalorder %v290, 0
        %v293 = vxor.u32 %v287, 2147483648
        %v294 = vsel %vm292, %v279, %v293
        %vm295 = vcmp.eq.s32.totalorder %v290, 2
        %v296 = vxor.u32 %v279, 2147483648
        %v297 = vsel %vm295, %v296, %v287
        %v298 = vsel %vm291, %v294, %v297
        %v299 = vsel %vm288, nan, %v298
        %300 = vst [vmem:[%s129] sm:$0xff] %v299
        %v301 = vand.u32 2147483647, %v144
        %vm302 = vcmp.le.f32.partialorder %v301, 0.7853982
        %vm303 = vcmp.lt.s32.totalorder %v144, 0
        %v304 = vand.u32 %v144, 2139095040
        %v305 = vshrl.u32 %v304, 23
        %v306 = vsub.s32 %v305, 127
        %v307 = vand.u32 2147483647, %v144
        %v308 = vand.u32 %v307, 8388607
        %v309 = vor.u32 %v308, 8388608
        %v310 = vsub.s32 0, %v309
        %v311 = vadd.s32 %v306, 1
        %vm312 = vcmp.gt.s32.totalorder %v311, 0
        %v313 = vsel %vm312, %v311, 0
        %v314 = vshrl.u32 %v313, 5
        %v315 = vand.u32 %v313, 31
        %v316 = vsub.s32 32, %v315
        %v317 = vshrl.u32 683565275, %v316
        %v318 = vshll.u32 683565275, %v315
        %v319 = vshrl.u32 2475754826, %v316
        %v320 = vor.u32 %v318, %v319
        %v321 = vshll.u32 2475754826, %v315
        %v322 = vshrl.u32 2131351028, %v316
        %v323 = vor.u32 %v321, %v322
        %v324 = vshll.u32 2131351028, %v315
        %v325 = vshrl.u32 2102212464, %v316
        %v326 = vor.u32 %v324, %v325
        %v327 = vshll.u32 2102212464, %v315
        %v328 = vshrl.u32 920167782, %v316
        %v329 = vor.u32 %v327, %v328
        %v330 = vshll.u32 920167782, %v315
        %v331 = vshrl.u32 1326507024, %v316
        %v332 = vor.u32 %v330, %v331
        %vm333 = vcmp.lt.s32.totalorder %v314, 1
        %vm334 = vcmp.lt.s32.totalorder %v314, 2
        %vm335 = vcmp.lt.s32.totalorder %v314, 3
        %vm336 = vcmp.lt.s32.totalorder %v314, 4
        %v337 = vsel %vm333, %v317, %v320
        %v338 = vsel %vm336, %v326, 2102212464
        %v339 = vsel %vm335, %v323, %v338
        %v340 = vsel %vm334, %v337, %v339
        %v341 = vsel %vm333, %v320, %v323
        %v342 = vsel %vm336, %v329, 920167782
        %v343 = vsel %vm335, %v326, %v342
        %v344 = vsel %vm334, %v341, %v343
        %v345 = vsel %vm333, %v323, %v326
        %v346 = vsel %vm336, %v332, 1326507024
        %v347 = vsel %vm335, %v329, %v346
        %v348 = vsel %vm334, %v345, %v347
        %v349 = vshll.u32 %v309, 8
        %v350 = vand.u32 %v349, 65535
        %v351 = vshrl.u32 %v349, 16
        %v352 = vand.u32 %v348, 65535
        %v353 = vshrl.u32 %v348, 16
        %v354 = vmul.u32 %v350, %v352
        %v355 = vmul.u32 %v350, %v353
        %v356 = vmul.u32 %v351, %v352
        %v357 = vmul.u32 %v351, %v353
        %v358 = vshll.u32 %v355, 16
        %v359 = vshrl.u32 %v355, 16
        %v360 = vshll.u32 %v356, 16
        %v361 = vshrl.u32 %v356, 16
        %vm362 = vc.u32 %v354, %v358
        %v363 = vsel %vm362, 1, 0
        %v364 = vadd.s32 %v354, %v358
        %v365 = vadd.s32 %v357, %v363
        %vm366 = vc.u32 %v364, %v360
        %v367 = vsel %vm366, 1, 0
        %v368 = vadd.s32 %v364, %v360
        %v369 = vadd.s32 %v365, %v367
        %v370 = vadd.s32 %v369, %v359
        %v371 = vadd.s32 %v370, %v361
        %v372 = vand.u32 %v349, 65535
        %v373 = vshrl.u32 %v349, 16
        %v374 = vand.u32 %v344, 65535
        %v375 = vshrl.u32 %v344, 16
        %v376 = vmul.u32 %v372, %v374
        %v377 = vmul.u32 %v372, %v375
        %v378 = vmul.u32 %v373, %v374
        %v379 = vmul.u32 %v373, %v375
        %v380 = vshll.u32 %v377, 16
        %v381 = vshrl.u32 %v377, 16
        %v382 = vshll.u32 %v378, 16
        %v383 = vshrl.u32 %v378, 16
        %vm384 = vc.u32 %v376, %v380
        %v385 = vsel %vm384, 1, 0
        %v386 = vadd.s32 %v376, %v380
        %v387 = vadd.s32 %v379, %v385
        %vm388 = vc.u32 %v386, %v382
        %v389 = vsel %vm388, 1, 0
        %v390 = vadd.s32 %v386, %v382
        %v391 = vadd.s32 %v387, %v389
        %v392 = vadd.s32 %v391, %v381
        %v393 = vadd.s32 %v392, %v383
        %v394 = vmul.u32 %v349, %v340
        %v395 = vadd.s32 %v371, %v390
        %vm396 = vc.u32 %v371, %v390
        %v397 = vadd.s32 %v393, 1
        %v398 = vsel %vm396, %v397, %v393
        %v399 = vadd.s32 %v394, %v398
        %v400 = vadd.s32 %v399, 536870912
        %v401 = vshrl.u32 %v400, 30
        %v402 = vshll.u32 %v401, 30
        %v403 = vsub.s32 %v399, %v402
        %vm404 = vcmp.lt.s32.totalorder %v403, 0
        %v405 = vsub.s32 0, %v403
        %v406 = vsel %vm404, %v405, %v403
        %v407 = vclz %v406
        %v408 = vsub.s32 %v407, 2
        %vm409 = vcmp.gt.s32.totalorder 0, %v408
        %v410 = vsel %vm409, 0, %v408
        %v411 = vsub.s32 32, %v410
        %v412 = vshll.u32 %v403, %v410
        %v413 = vshrl.u32 %v395, %v411
        %v414 = vor.u32 %v412, %v413
        %v415 = vsub.s32 4294967266, %v410
        %v416 = vadd.s32 %v415, 127
        %v417 = vshll.u32 %v416, 23
        %v418 = vor.u32 4788187, %v417
        %v419 = vand.u32 2147483647, %v418
        %v421 = vcvt.s32.f32 %v414
        %v422 = vmul.f32 %v421, %v419
        %v423 = vxor.u32 %v422, 2147483648
        %v424 = vsel %vm303, %v423, %v422
        %v425 = vsub.s32 4, %v401
        %v426 = vsel %vm303, %v425, %v401
        %v427 = vsel %vm302, %v144, %v424
        %v428 = vsel %vm302, 0, %v426
        %v429 = vmul.f32 %v427, %v427
        %v430 = vmul.f32 %v429, -0.001358992
        %v431 = vadd.f32 %v430, 0.041655596
        %v432 = vmul.f32 %v429, %v431
        %v433 = vadd.f32 %v432, -0.4999988
        %v434 = vmul.f32 %v429, %v433
        %v435 = vadd.f32 1.0, %v434
        %v436 = vmul.f32 %v427, %v427
        %v437 = vmul.f32 %v436, -0.00019511016
        %v438 = vadd.f32 %v437, 0.008332121
        %v439 = vmul.f32 %v436, %v438
        %v440 = vadd.f32 %v439, -0.16666654
        %v441 = vmul.f32 %v436, %v440
        %v442 = vadd.f32 %v441, 1.0
        %v443 = vmul.f32 %v442, %v427
        %vm444 = vweird.f32 %v144
        %v445 = vand.u32 %v428, 3
        %vm446 = vcmp.lt.s32.totalorder %v445, 2
        %vm447 = vcmp.eq.s32.totalorder %v445, 0
        %v448 = vxor.u32 %v443, 2147483648
        %v449 = vsel %vm447, %v435, %v448
        %vm450 = vcmp.eq.s32.totalorder %v445, 2
        %v451 = vxor.u32 %v435, 2147483648
        %v452 = vsel %vm450, %v451, %v443
        %v453 = vsel %vm446, %v449, %v452
        %v454 = vsel %vm444, nan, %v453
        %s455 = scalar_lea.vmem %s129, 48 [#allocation4]
        %456 = vst [vmem:[%s455] sm:$0xff] %v454
        %v457 = vmul.f32 %v143, 1.6755161
        %v458 = vand.u32 2147483647, %v457
        %vm459 = vcmp.le.f32.partialorder %v458, 0.7853982
        %vm460 = vcmp.lt.s32.totalorder %v457, 0
        %v461 = vand.u32 %v457, 2139095040
        %v462 = vshrl.u32 %v461, 23
        %v463 = vsub.s32 %v462, 127
        %v464 = vand.u32 2147483647, %v457
        %v465 = vand.u32 %v464, 8388607
        %v466 = vor.u32 %v465, 8388608
        %v467 = vsub.s32 0, %v466
        %v468 = vadd.s32 %v463, 1
        %vm469 = vcmp.gt.s32.totalorder %v468, 0
        %v470 = vsel %vm469, %v468, 0
        %v471 = vshrl.u32 %v470, 5
        %v472 = vand.u32 %v470, 31
        %v473 = vsub.s32 32, %v472
        %v474 = vshrl.u32 683565275, %v473
        %v475 = vshll.u32 683565275, %v472
        %v476 = vshrl.u32 2475754826, %v473
        %v477 = vor.u32 %v475, %v476
        %v478 = vshll.u32 2475754826, %v472
        %v479 = vshrl.u32 2131351028, %v473
        %v480 = vor.u32 %v478, %v479
        %v481 = vshll.u32 2131351028, %v472
        %v482 = vshrl.u32 2102212464, %v473
        %v483 = vor.u32 %v481, %v482
        %v484 = vshll.u32 2102212464, %v472
        %v485 = vshrl.u32 920167782, %v473
        %v486 = vor.u32 %v484, %v485
        %v487 = vshll.u32 920167782, %v472
        %v488 = vshrl.u32 1326507024, %v473
        %v489 = vor.u32 %v487, %v488
        %vm490 = vcmp.lt.s32.totalorder %v471, 1
        %vm491 = vcmp.lt.s32.totalorder %v471, 2
        %vm492 = vcmp.lt.s32.totalorder %v471, 3
        %vm493 = vcmp.lt.s32.totalorder %v471, 4
        %v494 = vsel %vm490, %v474, %v477
        %v495 = vsel %vm493, %v483, 2102212464
        %v496 = vsel %vm492, %v480, %v495
        %v497 = vsel %vm491, %v494, %v496
        %v498 = vsel %vm490, %v477, %v480
        %v499 = vsel %vm493, %v486, 920167782
        %v500 = vsel %vm492, %v483, %v499
        %v501 = vsel %vm491, %v498, %v500
        %v502 = vsel %vm490, %v480, %v483
        %v503 = vsel %vm493, %v489, 1326507024
        %v504 = vsel %vm492, %v486, %v503
        %v505 = vsel %vm491, %v502, %v504
        %v506 = vshll.u32 %v466, 8
        %v507 = vand.u32 %v506, 65535
        %v508 = vshrl.u32 %v506, 16
        %v509 = vand.u32 %v505, 65535
        %v510 = vshrl.u32 %v505, 16
        %v511 = vmul.u32 %v507, %v509
        %v512 = vmul.u32 %v507, %v510
        %v513 = vmul.u32 %v508, %v509
        %v514 = vmul.u32 %v508, %v510
        %v515 = vshll.u32 %v512, 16
        %v516 = vshrl.u32 %v512, 16
        %v517 = vshll.u32 %v513, 16
        %v518 = vshrl.u32 %v513, 16
        %vm519 = vc.u32 %v511, %v515
        %v520 = vsel %vm519, 1, 0
        %v521 = vadd.s32 %v511, %v515
        %v522 = vadd.s32 %v514, %v520
        %vm523 = vc.u32 %v521, %v517
        %v524 = vsel %vm523, 1, 0
        %v525 = vadd.s32 %v521, %v517
        %v526 = vadd.s32 %v522, %v524
        %v527 = vadd.s32 %v526, %v516
        %v528 = vadd.s32 %v527, %v518
        %v529 = vand.u32 %v506, 65535
        %v530 = vshrl.u32 %v506, 16
        %v531 = vand.u32 %v501, 65535
        %v532 = vshrl.u32 %v501, 16
        %v533 = vmul.u32 %v529, %v531
        %v534 = vmul.u32 %v529, %v532
        %v535 = vmul.u32 %v530, %v531
        %v536 = vmul.u32 %v530, %v532
        %v537 = vshll.u32 %v534, 16
        %v538 = vshrl.u32 %v534, 16
        %v539 = vshll.u32 %v535, 16
        %v540 = vshrl.u32 %v535, 16
        %vm541 = vc.u32 %v533, %v537
        %v542 = vsel %vm541, 1, 0
        %v543 = vadd.s32 %v533, %v537
        %v544 = vadd.s32 %v536, %v542
        %vm545 = vc.u32 %v543, %v539
        %v546 = vsel %vm545, 1, 0
        %v547 = vadd.s32 %v543, %v539
        %v548 = vadd.s32 %v544, %v546
        %v549 = vadd.s32 %v548, %v538
        %v550 = vadd.s32 %v549, %v540
        %v551 = vmul.u32 %v506, %v497
        %v552 = vadd.s32 %v528, %v547
        %vm553 = vc.u32 %v528, %v547
        %v554 = vadd.s32 %v550, 1
        %v555 = vsel %vm553, %v554, %v550
        %v556 = vadd.s32 %v551, %v555
        %v557 = vadd.s32 %v556, 536870912
        %v558 = vshrl.u32 %v557, 30
        %v559 = vshll.u32 %v558, 30
        %v560 = vsub.s32 %v556, %v559
        %vm561 = vcmp.lt.s32.totalorder %v560, 0
        %v562 = vsub.s32 0, %v560
        %v563 = vsel %vm561, %v562, %v560
        %v564 = vclz %v563
        %v565 = vsub.s32 %v564, 2
        %vm566 = vcmp.gt.s32.totalorder 0, %v565
        %v567 = vsel %vm566, 0, %v565
        %v568 = vsub.s32 32, %v567
        %v569 = vshll.u32 %v560, %v567
        %v570 = vshrl.u32 %v552, %v568
        %v571 = vor.u32 %v569, %v570
        %v572 = vsub.s32 4294967266, %v567
        %v573 = vadd.s32 %v572, 127
        %v574 = vshll.u32 %v573, 23
        %v575 = vor.u32 4788187, %v574
        %v576 = vand.u32 2147483647, %v575
        %v578 = vcvt.s32.f32 %v571
        %v579 = vmul.f32 %v578, %v576
        %v580 = vxor.u32 %v579, 2147483648
        %v581 = vsel %vm460, %v580, %v579
        %v582 = vsub.s32 4, %v558
        %v583 = vsel %vm460, %v582, %v558
        %v584 = vsel %vm459, %v457, %v581
        %v585 = vsel %vm459, 0, %v583
        %v586 = vmul.f32 %v584, %v584
        %v587 = vmul.f32 %v586, -0.001358992
        %v588 = vadd.f32 %v587, 0.041655596
        %v589 = vmul.f32 %v586, %v588
        %v590 = vadd.f32 %v589, -0.4999988
        %v591 = vmul.f32 %v586, %v590
        %v592 = vadd.f32 1.0, %v591
        %v593 = vmul.f32 %v584, %v584
        %v594 = vmul.f32 %v593, -0.00019511016
        %v595 = vadd.f32 %v594, 0.008332121
        %v596 = vmul.f32 %v593, %v595
        %v597 = vadd.f32 %v596, -0.16666654
        %v598 = vmul.f32 %v593, %v597
        %v599 = vadd.f32 %v598, 1.0
        %v600 = vmul.f32 %v599, %v584
        %vm601 = vweird.f32 %v457
        %v602 = vadd.s32 %v585, 3
        %v603 = vand.u32 %v602, 3
        %vm604 = vcmp.lt.s32.totalorder %v603, 2
        %vm605 = vcmp.eq.s32.totalorder %v603, 0
        %v606 = vxor.u32 %v600, 2147483648
        %v607 = vsel %vm605, %v592, %v606
        %vm608 = vcmp.eq.s32.totalorder %v603, 2
        %v609 = vxor.u32 %v592, 2147483648
        %v610 = vsel %vm608, %v609, %v600
        %v611 = vsel %vm604, %v607, %v610
        %v612 = vsel %vm601, nan, %v611
        %s613 = scalar_lea.vmem %s129, 8 [#allocation4]
        %614 = vst [vmem:[%s613] sm:$0xff] %v612
        %v615 = vand.u32 2147483647, %v457
        %vm616 = vcmp.le.f32.partialorder %v615, 0.7853982
        %vm617 = vcmp.lt.s32.totalorder %v457, 0
        %v618 = vand.u32 %v457, 2139095040
        %v619 = vshrl.u32 %v618, 23
        %v620 = vsub.s32 %v619, 127
        %v621 = vand.u32 2147483647, %v457
        %v622 = vand.u32 %v621, 8388607
        %v623 = vor.u32 %v622, 8388608
        %v624 = vsub.s32 0, %v623
        %v625 = vadd.s32 %v620, 1
        %vm626 = vcmp.gt.s32.totalorder %v625, 0
        %v627 = vsel %vm626, %v625, 0
        %v628 = vshrl.u32 %v627, 5
        %v629 = vand.u32 %v627, 31
        %v630 = vsub.s32 32, %v629
        %v631 = vshrl.u32 683565275, %v630
        %v632 = vshll.u32 683565275, %v629
        %v633 = vshrl.u32 2475754826, %v630
        %v634 = vor.u32 %v632, %v633
        %v635 = vshll.u32 2475754826, %v629
        %v636 = vshrl.u32 2131351028, %v630
        %v637 = vor.u32 %v635, %v636
        %v638 = vshll.u32 2131351028, %v629
        %v639 = vshrl.u32 2102212464, %v630
        %v640 = vor.u32 %v638, %v639
        %v641 = vshll.u32 2102212464, %v629
        %v642 = vshrl.u32 920167782, %v630
        %v643 = vor.u32 %v641, %v642
        %v644 = vshll.u32 920167782, %v629
        %v645 = vshrl.u32 1326507024, %v630
        %v646 = vor.u32 %v644, %v645
        %vm647 = vcmp.lt.s32.totalorder %v628, 1
        %vm648 = vcmp.lt.s32.totalorder %v628, 2
        %vm649 = vcmp.lt.s32.totalorder %v628, 3
        %vm650 = vcmp.lt.s32.totalorder %v628, 4
        %v651 = vsel %vm647, %v631, %v634
        %v652 = vsel %vm650, %v640, 2102212464
        %v653 = vsel %vm649, %v637, %v652
        %v654 = vsel %vm648, %v651, %v653
        %v655 = vsel %vm647, %v634, %v637
        %v656 = vsel %vm650, %v643, 920167782
        %v657 = vsel %vm649, %v640, %v656
        %v658 = vsel %vm648, %v655, %v657
        %v659 = vsel %vm647, %v637, %v640
        %v660 = vsel %vm650, %v646, 1326507024
        %v661 = vsel %vm649, %v643, %v660
        %v662 = vsel %vm648, %v659, %v661
        %v663 = vshll.u32 %v623, 8
        %v664 = vand.u32 %v663, 65535
        %v665 = vshrl.u32 %v663, 16
        %v666 = vand.u32 %v662, 65535
        %v667 = vshrl.u32 %v662, 16
        %v668 = vmul.u32 %v664, %v666
        %v669 = vmul.u32 %v664, %v667
        %v670 = vmul.u32 %v665, %v666
        %v671 = vmul.u32 %v665, %v667
        %v672 = vshll.u32 %v669, 16
        %v673 = vshrl.u32 %v669, 16
        %v674 = vshll.u32 %v670, 16
        %v675 = vshrl.u32 %v670, 16
        %vm676 = vc.u32 %v668, %v672
        %v677 = vsel %vm676, 1, 0
        %v678 = vadd.s32 %v668, %v672
        %v679 = vadd.s32 %v671, %v677
        %vm680 = vc.u32 %v678, %v674
        %v681 = vsel %vm680, 1, 0
        %v682 = vadd.s32 %v678, %v674
        %v683 = vadd.s32 %v679, %v681
        %v684 = vadd.s32 %v683, %v673
        %v685 = vadd.s32 %v684, %v675
        %v686 = vand.u32 %v663, 65535
        %v687 = vshrl.u32 %v663, 16
        %v688 = vand.u32 %v658, 65535
        %v689 = vshrl.u32 %v658, 16
        %v690 = vmul.u32 %v686, %v688
        %v691 = vmul.u32 %v686, %v689
        %v692 = vmul.u32 %v687, %v688
        %v693 = vmul.u32 %v687, %v689
        %v694 = vshll.u32 %v691, 16
        %v695 = vshrl.u32 %v691, 16
        %v696 = vshll.u32 %v692, 16
        %v697 = vshrl.u32 %v692, 16
        %vm698 = vc.u32 %v690, %v694
        %v699 = vsel %vm698, 1, 0
        %v700 = vadd.s32 %v690, %v694
        %v701 = vadd.s32 %v693, %v699
        %vm702 = vc.u32 %v700, %v696
        %v703 = vsel %vm702, 1, 0
        %v704 = vadd.s32 %v700, %v696
        %v705 = vadd.s32 %v701, %v703
        %v706 = vadd.s32 %v705, %v695
        %v707 = vadd.s32 %v706, %v697
        %v708 = vmul.u32 %v663, %v654
        %v709 = vadd.s32 %v685, %v704
        %vm710 = vc.u32 %v685, %v704
        %v711 = vadd.s32 %v707, 1
        %v712 = vsel %vm710, %v711, %v707
        %v713 = vadd.s32 %v708, %v712
        %v714 = vadd.s32 %v713, 536870912
        %v715 = vshrl.u32 %v714, 30
        %v716 = vshll.u32 %v715, 30
        %v717 = vsub.s32 %v713, %v716
        %vm718 = vcmp.lt.s32.totalorder %v717, 0
        %v719 = vsub.s32 0, %v717
        %v720 = vsel %vm718, %v719, %v717
        %v721 = vclz %v720
        %v722 = vsub.s32 %v721, 2
        %vm723 = vcmp.gt.s32.totalorder 0, %v722
        %v724 = vsel %vm723, 0, %v722
        %v725 = vsub.s32 32, %v724
        %v726 = vshll.u32 %v717, %v724
        %v727 = vshrl.u32 %v709, %v725
        %v728 = vor.u32 %v726, %v727
        %v729 = vsub.s32 4294967266, %v724
        %v730 = vadd.s32 %v729, 127
        %v731 = vshll.u32 %v730, 23
        %v732 = vor.u32 4788187, %v731
        %v733 = vand.u32 2147483647, %v732
        %v735 = vcvt.s32.f32 %v728
        %v736 = vmul.f32 %v735, %v733
        %v737 = vxor.u32 %v736, 2147483648
        %v738 = vsel %vm617, %v737, %v736
        %v739 = vsub.s32 4, %v715
        %v740 = vsel %vm617, %v739, %v715
        %v741 = vsel %vm616, %v457, %v738
        %v742 = vsel %vm616, 0, %v740
        %v743 = vmul.f32 %v741, %v741
        %v744 = vmul.f32 %v743, -0.001358992
        %v745 = vadd.f32 %v744, 0.041655596
        %v746 = vmul.f32 %v743, %v745
        %v747 = vadd.f32 %v746, -0.4999988
        %v748 = vmul.f32 %v743, %v747
        %v749 = vadd.f32 1.0, %v748
        %v750 = vmul.f32 %v741, %v741
        %v751 = vmul.f32 %v750, -0.00019511016
        %v752 = vadd.f32 %v751, 0.008332121
        %v753 = vmul.f32 %v750, %v752
        %v754 = vadd.f32 %v753, -0.16666654
        %v755 = vmul.f32 %v750, %v754
        %v756 = vadd.f32 %v755, 1.0
        %v757 = vmul.f32 %v756, %v741
        %vm758 = vweird.f32 %v457
        %v759 = vand.u32 %v742, 3
        %vm760 = vcmp.lt.s32.totalorder %v759, 2
        %vm761 = vcmp.eq.s32.totalorder %v759, 0
        %v762 = vxor.u32 %v757, 2147483648
        %v763 = vsel %vm761, %v749, %v762
        %vm764 = vcmp.eq.s32.totalorder %v759, 2
        %v765 = vxor.u32 %v749, 2147483648
        %v766 = vsel %vm764, %v765, %v757
        %v767 = vsel %vm760, %v763, %v766
        %v768 = vsel %vm758, nan, %v767
        %s769 = scalar_lea.vmem %s129, 56 [#allocation4]
        %770 = vst [vmem:[%s769] sm:$0xff] %v768
        %v771 = vmul.f32 %v143, 6.7020645
        %v772 = vand.u32 2147483647, %v771
        %vm773 = vcmp.le.f32.partialorder %v772, 0.7853982
        %vm774 = vcmp.lt.s32.totalorder %v771, 0
        %v775 = vand.u32 %v771, 2139095040
        %v776 = vshrl.u32 %v775, 23
        %v777 = vsub.s32 %v776, 127
        %v778 = vand.u32 2147483647, %v771
        %v779 = vand.u32 %v778, 8388607
        %v780 = vor.u32 %v779, 8388608
        %v781 = vsub.s32 0, %v780
        %v782 = vadd.s32 %v777, 1
        %vm783 = vcmp.gt.s32.totalorder %v782, 0
        %v784 = vsel %vm783, %v782, 0
        %v785 = vshrl.u32 %v784, 5
        %v786 = vand.u32 %v784, 31
        %v787 = vsub.s32 32, %v786
        %v788 = vshrl.u32 683565275, %v787
        %v789 = vshll.u32 683565275, %v786
        %v790 = vshrl.u32 2475754826, %v787
        %v791 = vor.u32 %v789, %v790
        %v792 = vshll.u32 2475754826, %v786
        %v793 = vshrl.u32 2131351028, %v787
        %v794 = vor.u32 %v792, %v793
        %v795 = vshll.u32 2131351028, %v786
        %v796 = vshrl.u32 2102212464, %v787
        %v797 = vor.u32 %v795, %v796
        %v798 = vshll.u32 2102212464, %v786
        %v799 = vshrl.u32 920167782, %v787
        %v800 = vor.u32 %v798, %v799
        %v801 = vshll.u32 920167782, %v786
        %v802 = vshrl.u32 1326507024, %v787
        %v803 = vor.u32 %v801, %v802
        %vm804 = vcmp.lt.s32.totalorder %v785, 1
        %vm805 = vcmp.lt.s32.totalorder %v785, 2
        %vm806 = vcmp.lt.s32.totalorder %v785, 3
        %vm807 = vcmp.lt.s32.totalorder %v785, 4
        %v808 = vsel %vm804, %v788, %v791
        %v809 = vsel %vm807, %v797, 2102212464
        %v810 = vsel %vm806, %v794, %v809
        %v811 = vsel %vm805, %v808, %v810
        %v812 = vsel %vm804, %v791, %v794
        %v813 = vsel %vm807, %v800, 920167782
        %v814 = vsel %vm806, %v797, %v813
        %v815 = vsel %vm805, %v812, %v814
        %v816 = vsel %vm804, %v794, %v797
        %v817 = vsel %vm807, %v803, 1326507024
        %v818 = vsel %vm806, %v800, %v817
        %v819 = vsel %vm805, %v816, %v818
        %v820 = vshll.u32 %v780, 8
        %v821 = vand.u32 %v820, 65535
        %v822 = vshrl.u32 %v820, 16
        %v823 = vand.u32 %v819, 65535
        %v824 = vshrl.u32 %v819, 16
        %v825 = vmul.u32 %v821, %v823
        %v826 = vmul.u32 %v821, %v824
        %v827 = vmul.u32 %v822, %v823
        %v828 = vmul.u32 %v822, %v824
        %v829 = vshll.u32 %v826, 16
        %v830 = vshrl.u32 %v826, 16
        %v831 = vshll.u32 %v827, 16
        %v832 = vshrl.u32 %v827, 16
        %vm833 = vc.u32 %v825, %v829
        %v834 = vsel %vm833, 1, 0
        %v835 = vadd.s32 %v825, %v829
        %v836 = vadd.s32 %v828, %v834
        %vm837 = vc.u32 %v835, %v831
        %v838 = vsel %vm837, 1, 0
        %v839 = vadd.s32 %v835, %v831
        %v840 = vadd.s32 %v836, %v838
        %v841 = vadd.s32 %v840, %v830
        %v842 = vadd.s32 %v841, %v832
        %v843 = vand.u32 %v820, 65535
        %v844 = vshrl.u32 %v820, 16
        %v845 = vand.u32 %v815, 65535
        %v846 = vshrl.u32 %v815, 16
        %v847 = vmul.u32 %v843, %v845
        %v848 = vmul.u32 %v843, %v846
        %v849 = vmul.u32 %v844, %v845
        %v850 = vmul.u32 %v844, %v846
        %v851 = vshll.u32 %v848, 16
        %v852 = vshrl.u32 %v848, 16
        %v853 = vshll.u32 %v849, 16
        %v854 = vshrl.u32 %v849, 16
        %vm855 = vc.u32 %v847, %v851
        %v856 = vsel %vm855, 1, 0
        %v857 = vadd.s32 %v847, %v851
        %v858 = vadd.s32 %v850, %v856
        %vm859 = vc.u32 %v857, %v853
        %v860 = vsel %vm859, 1, 0
        %v861 = vadd.s32 %v857, %v853
        %v862 = vadd.s32 %v858, %v860
        %v863 = vadd.s32 %v862, %v852
        %v864 = vadd.s32 %v863, %v854
        %v865 = vmul.u32 %v820, %v811
        %v866 = vadd.s32 %v842, %v861
        %vm867 = vc.u32 %v842, %v861
        %v868 = vadd.s32 %v864, 1
        %v869 = vsel %vm867, %v868, %v864
        %v870 = vadd.s32 %v865, %v869
        %v871 = vadd.s32 %v870, 536870912
        %v872 = vshrl.u32 %v871, 30
        %v873 = vshll.u32 %v872, 30
        %v874 = vsub.s32 %v870, %v873
        %vm875 = vcmp.lt.s32.totalorder %v874, 0
        %v876 = vsub.s32 0, %v874
        %v877 = vsel %vm875, %v876, %v874
        %v878 = vclz %v877
        %v879 = vsub.s32 %v878, 2
        %vm880 = vcmp.gt.s32.totalorder 0, %v879
        %v881 = vsel %vm880, 0, %v879
        %v882 = vsub.s32 32, %v881
        %v883 = vshll.u32 %v874, %v881
        %v884 = vshrl.u32 %v866, %v882
        %v885 = vor.u32 %v883, %v884
        %v886 = vsub.s32 4294967266, %v881
        %v887 = vadd.s32 %v886, 127
        %v888 = vshll.u32 %v887, 23
        %v889 = vor.u32 4788187, %v888
        %v890 = vand.u32 2147483647, %v889
        %v892 = vcvt.s32.f32 %v885
        %v893 = vmul.f32 %v892, %v890
        %v894 = vxor.u32 %v893, 2147483648
        %v895 = vsel %vm774, %v894, %v893
        %v896 = vsub.s32 4, %v872
        %v897 = vsel %vm774, %v896, %v872
        %v898 = vsel %vm773, %v771, %v895
        %v899 = vsel %vm773, 0, %v897
        %v900 = vmul.f32 %v898, %v898
        %v901 = vmul.f32 %v900, -0.001358992
        %v902 = vadd.f32 %v901, 0.041655596
        %v903 = vmul.f32 %v900, %v902
        %v904 = vadd.f32 %v903, -0.4999988
        %v905 = vmul.f32 %v900, %v904
        %v906 = vadd.f32 1.0, %v905
        %v907 = vmul.f32 %v898, %v898
        %v908 = vmul.f32 %v907, -0.00019511016
        %v909 = vadd.f32 %v908, 0.008332121
        %v910 = vmul.f32 %v907, %v909
        %v911 = vadd.f32 %v910, -0.16666654
        %v912 = vmul.f32 %v907, %v911
        %v913 = vadd.f32 %v912, 1.0
        %v914 = vmul.f32 %v913, %v898
        %vm915 = vweird.f32 %v771
        %v916 = vadd.s32 %v899, 3
        %v917 = vand.u32 %v916, 3
        %vm918 = vcmp.lt.s32.totalorder %v917, 2
        %vm919 = vcmp.eq.s32.totalorder %v917, 0
        %v920 = vxor.u32 %v914, 2147483648
        %v921 = vsel %vm919, %v906, %v920
        %vm922 = vcmp.eq.s32.totalorder %v917, 2
        %v923 = vxor.u32 %v906, 2147483648
        %v924 = vsel %vm922, %v923, %v914
        %v925 = vsel %vm918, %v921, %v924
        %v926 = vsel %vm915, nan, %v925
        %s927 = scalar_lea.vmem %s129, 16 [#allocation4]
        %928 = vst [vmem:[%s927] sm:$0xff] %v926
        %v929 = vand.u32 2147483647, %v771
        %vm930 = vcmp.le.f32.partialorder %v929, 0.7853982
        %vm931 = vcmp.lt.s32.totalorder %v771, 0
        %v932 = vand.u32 %v771, 2139095040
        %v933 = vshrl.u32 %v932, 23
        %v934 = vsub.s32 %v933, 127
        %v935 = vand.u32 2147483647, %v771
        %v936 = vand.u32 %v935, 8388607
        %v937 = vor.u32 %v936, 8388608
        %v938 = vsub.s32 0, %v937
        %v939 = vadd.s32 %v934, 1
        %vm940 = vcmp.gt.s32.totalorder %v939, 0
        %v941 = vsel %vm940, %v939, 0
        %v942 = vshrl.u32 %v941, 5
        %v943 = vand.u32 %v941, 31
        %v944 = vsub.s32 32, %v943
        %v945 = vshrl.u32 683565275, %v944
        %v946 = vshll.u32 683565275, %v943
        %v947 = vshrl.u32 2475754826, %v944
        %v948 = vor.u32 %v946, %v947
        %v949 = vshll.u32 2475754826, %v943
        %v950 = vshrl.u32 2131351028, %v944
        %v951 = vor.u32 %v949, %v950
        %v952 = vshll.u32 2131351028, %v943
        %v953 = vshrl.u32 2102212464, %v944
        %v954 = vor.u32 %v952, %v953
        %v955 = vshll.u32 2102212464, %v943
        %v956 = vshrl.u32 920167782, %v944
        %v957 = vor.u32 %v955, %v956
        %v958 = vshll.u32 920167782, %v943
        %v959 = vshrl.u32 1326507024, %v944
        %v960 = vor.u32 %v958, %v959
        %vm961 = vcmp.lt.s32.totalorder %v942, 1
        %vm962 = vcmp.lt.s32.totalorder %v942, 2
        %vm963 = vcmp.lt.s32.totalorder %v942, 3
        %vm964 = vcmp.lt.s32.totalorder %v942, 4
        %v965 = vsel %vm961, %v945, %v948
        %v966 = vsel %vm964, %v954, 2102212464
        %v967 = vsel %vm963, %v951, %v966
        %v968 = vsel %vm962, %v965, %v967
        %v969 = vsel %vm961, %v948, %v951
        %v970 = vsel %vm964, %v957, 920167782
        %v971 = vsel %vm963, %v954, %v970
        %v972 = vsel %vm962, %v969, %v971
        %v973 = vsel %vm961, %v951, %v954
        %v974 = vsel %vm964, %v960, 1326507024
        %v975 = vsel %vm963, %v957, %v974
        %v976 = vsel %vm962, %v973, %v975
        %v977 = vshll.u32 %v937, 8
        %v978 = vand.u32 %v977, 65535
        %v979 = vshrl.u32 %v977, 16
        %v980 = vand.u32 %v976, 65535
        %v981 = vshrl.u32 %v976, 16
        %v982 = vmul.u32 %v978, %v980
        %v983 = vmul.u32 %v978, %v981
        %v984 = vmul.u32 %v979, %v980
        %v985 = vmul.u32 %v979, %v981
        %v986 = vshll.u32 %v983, 16
        %v987 = vshrl.u32 %v983, 16
        %v988 = vshll.u32 %v984, 16
        %v989 = vshrl.u32 %v984, 16
        %vm990 = vc.u32 %v982, %v986
        %v991 = vsel %vm990, 1, 0
        %v992 = vadd.s32 %v982, %v986
        %v993 = vadd.s32 %v985, %v991
        %vm994 = vc.u32 %v992, %v988
        %v995 = vsel %vm994, 1, 0
        %v996 = vadd.s32 %v992, %v988
        %v997 = vadd.s32 %v993, %v995
        %v998 = vadd.s32 %v997, %v987
        %v999 = vadd.s32 %v998, %v989
        %v1000 = vand.u32 %v977, 65535
        %v1001 = vshrl.u32 %v977, 16
        %v1002 = vand.u32 %v972, 65535
        %v1003 = vshrl.u32 %v972, 16
        %v1004 = vmul.u32 %v1000, %v1002
        %v1005 = vmul.u32 %v1000, %v1003
        %v1006 = vmul.u32 %v1001, %v1002
        %v1007 = vmul.u32 %v1001, %v1003
        %v1008 = vshll.u32 %v1005, 16
        %v1009 = vshrl.u32 %v1005, 16
        %v1010 = vshll.u32 %v1006, 16
        %v1011 = vshrl.u32 %v1006, 16
        %vm1012 = vc.u32 %v1004, %v1008
        %v1013 = vsel %vm1012, 1, 0
        %v1014 = vadd.s32 %v1004, %v1008
        %v1015 = vadd.s32 %v1007, %v1013
        %vm1016 = vc.u32 %v1014, %v1010
        %v1017 = vsel %vm1016, 1, 0
        %v1018 = vadd.s32 %v1014, %v1010
        %v1019 = vadd.s32 %v1015, %v1017
        %v1020 = vadd.s32 %v1019, %v1009
        %v1021 = vadd.s32 %v1020, %v1011
        %v1022 = vmul.u32 %v977, %v968
        %v1023 = vadd.s32 %v999, %v1018
        %vm1024 = vc.u32 %v999, %v1018
        %v1025 = vadd.s32 %v1021, 1
        %v1026 = vsel %vm1024, %v1025, %v1021
        %v1027 = vadd.s32 %v1022, %v1026
        %v1028 = vadd.s32 %v1027, 536870912
        %v1029 = vshrl.u32 %v1028, 30
        %v1030 = vshll.u32 %v1029, 30
        %v1031 = vsub.s32 %v1027, %v1030
        %vm1032 = vcmp.lt.s32.totalorder %v1031, 0
        %v1033 = vsub.s32 0, %v1031
        %v1034 = vsel %vm1032, %v1033, %v1031
        %v1035 = vclz %v1034
        %v1036 = vsub.s32 %v1035, 2
        %vm1037 = vcmp.gt.s32.totalorder 0, %v1036
        %v1038 = vsel %vm1037, 0, %v1036
        %v1039 = vsub.s32 32, %v1038
        %v1040 = vshll.u32 %v1031, %v1038
        %v1041 = vshrl.u32 %v1023, %v1039
        %v1042 = vor.u32 %v1040, %v1041
        %v1043 = vsub.s32 4294967266, %v1038
        %v1044 = vadd.s32 %v1043, 127
        %v1045 = vshll.u32 %v1044, 23
        %v1046 = vor.u32 4788187, %v1045
        %v1047 = vand.u32 2147483647, %v1046
        %v1049 = vcvt.s32.f32 %v1042
        %v1050 = vmul.f32 %v1049, %v1047
        %v1051 = vxor.u32 %v1050, 2147483648
        %v1052 = vsel %vm931, %v1051, %v1050
        %v1053 = vsub.s32 4, %v1029
        %v1054 = vsel %vm931, %v1053, %v1029
        %v1055 = vsel %vm930, %v771, %v1052
        %v1056 = vsel %vm930, 0, %v1054
        %v1057 = vmul.f32 %v1055, %v1055
        %v1058 = vmul.f32 %v1057, -0.001358992
        %v1059 = vadd.f32 %v1058, 0.041655596
        %v1060 = vmul.f32 %v1057, %v1059
        %v1061 = vadd.f32 %v1060, -0.4999988
        %v1062 = vmul.f32 %v1057, %v1061
        %v1063 = vadd.f32 1.0, %v1062
        %v1064 = vmul.f32 %v1055, %v1055
        %v1065 = vmul.f32 %v1064, -0.00019511016
        %v1066 = vadd.f32 %v1065, 0.008332121
        %v1067 = vmul.f32 %v1064, %v1066
        %v1068 = vadd.f32 %v1067, -0.16666654
        %v1069 = vmul.f32 %v1064, %v1068
        %v1070 = vadd.f32 %v1069, 1.0
        %v1071 = vmul.f32 %v1070, %v1055
        %vm1072 = vweird.f32 %v771
        %v1073 = vand.u32 %v1056, 3
        %vm1074 = vcmp.lt.s32.totalorder %v1073, 2
        %vm1075 = vcmp.eq.s32.totalorder %v1073, 0
        %v1076 = vxor.u32 %v1071, 2147483648
        %v1077 = vsel %vm1075, %v1063, %v1076
        %vm1078 = vcmp.eq.s32.totalorder %v1073, 2
        %v1079 = vxor.u32 %v1063, 2147483648
        %v1080 = vsel %vm1078, %v1079, %v1071
        %v1081 = vsel %vm1074, %v1077, %v1080
        %v1082 = vsel %vm1072, nan, %v1081
        %s1083 = scalar_lea.vmem %s129, 64 [#allocation4]
        %1084 = vst [vmem:[%s1083] sm:$0xff] %v1082
        %v1085 = vmul.f32 %v143, 26.808258
        %v1086 = vand.u32 2147483647, %v1085
        %vm1087 = vcmp.le.f32.partialorder %v1086, 0.7853982
        %vm1088 = vcmp.lt.s32.totalorder %v1085, 0
        %v1089 = vand.u32 %v1085, 2139095040
        %v1090 = vshrl.u32 %v1089, 23
        %v1091 = vsub.s32 %v1090, 127
        %v1092 = vand.u32 2147483647, %v1085
        %v1093 = vand.u32 %v1092, 8388607
        %v1094 = vor.u32 %v1093, 8388608
        %v1095 = vsub.s32 0, %v1094
        %v1096 = vadd.s32 %v1091, 1
        %vm1097 = vcmp.gt.s32.totalorder %v1096, 0
        %v1098 = vsel %vm1097, %v1096, 0
        %v1099 = vshrl.u32 %v1098, 5
        %v1100 = vand.u32 %v1098, 31
        %v1101 = vsub.s32 32, %v1100
        %v1102 = vshrl.u32 683565275, %v1101
        %v1103 = vshll.u32 683565275, %v1100
        %v1104 = vshrl.u32 2475754826, %v1101
        %v1105 = vor.u32 %v1103, %v1104
        %v1106 = vshll.u32 2475754826, %v1100
        %v1107 = vshrl.u32 2131351028, %v1101
        %v1108 = vor.u32 %v1106, %v1107
        %v1109 = vshll.u32 2131351028, %v1100
        %v1110 = vshrl.u32 2102212464, %v1101
        %v1111 = vor.u32 %v1109, %v1110
        %v1112 = vshll.u32 2102212464, %v1100
        %v1113 = vshrl.u32 920167782, %v1101
        %v1114 = vor.u32 %v1112, %v1113
        %v1115 = vshll.u32 920167782, %v1100
        %v1116 = vshrl.u32 1326507024, %v1101
        %v1117 = vor.u32 %v1115, %v1116
        %vm1118 = vcmp.lt.s32.totalorder %v1099, 1
        %vm1119 = vcmp.lt.s32.totalorder %v1099, 2
        %vm1120 = vcmp.lt.s32.totalorder %v1099, 3
        %vm1121 = vcmp.lt.s32.totalorder %v1099, 4
        %v1122 = vsel %vm1118, %v1102, %v1105
        %v1123 = vsel %vm1121, %v1111, 2102212464
        %v1124 = vsel %vm1120, %v1108, %v1123
        %v1125 = vsel %vm1119, %v1122, %v1124
        %v1126 = vsel %vm1118, %v1105, %v1108
        %v1127 = vsel %vm1121, %v1114, 920167782
        %v1128 = vsel %vm1120, %v1111, %v1127
        %v1129 = vsel %vm1119, %v1126, %v1128
        %v1130 = vsel %vm1118, %v1108, %v1111
        %v1131 = vsel %vm1121, %v1117, 1326507024
        %v1132 = vsel %vm1120, %v1114, %v1131
        %v1133 = vsel %vm1119, %v1130, %v1132
        %v1134 = vshll.u32 %v1094, 8
        %v1135 = vand.u32 %v1134, 65535
        %v1136 = vshrl.u32 %v1134, 16
        %v1137 = vand.u32 %v1133, 65535
        %v1138 = vshrl.u32 %v1133, 16
        %v1139 = vmul.u32 %v1135, %v1137
        %v1140 = vmul.u32 %v1135, %v1138
        %v1141 = vmul.u32 %v1136, %v1137
        %v1142 = vmul.u32 %v1136, %v1138
        %v1143 = vshll.u32 %v1140, 16
        %v1144 = vshrl.u32 %v1140, 16
        %v1145 = vshll.u32 %v1141, 16
        %v1146 = vshrl.u32 %v1141, 16
        %vm1147 = vc.u32 %v1139, %v1143
        %v1148 = vsel %vm1147, 1, 0
        %v1149 = vadd.s32 %v1139, %v1143
        %v1150 = vadd.s32 %v1142, %v1148
        %vm1151 = vc.u32 %v1149, %v1145
        %v1152 = vsel %vm1151, 1, 0
        %v1153 = vadd.s32 %v1149, %v1145
        %v1154 = vadd.s32 %v1150, %v1152
        %v1155 = vadd.s32 %v1154, %v1144
        %v1156 = vadd.s32 %v1155, %v1146
        %v1157 = vand.u32 %v1134, 65535
        %v1158 = vshrl.u32 %v1134, 16
        %v1159 = vand.u32 %v1129, 65535
        %v1160 = vshrl.u32 %v1129, 16
        %v1161 = vmul.u32 %v1157, %v1159
        %v1162 = vmul.u32 %v1157, %v1160
        %v1163 = vmul.u32 %v1158, %v1159
        %v1164 = vmul.u32 %v1158, %v1160
        %v1165 = vshll.u32 %v1162, 16
        %v1166 = vshrl.u32 %v1162, 16
        %v1167 = vshll.u32 %v1163, 16
        %v1168 = vshrl.u32 %v1163, 16
        %vm1169 = vc.u32 %v1161, %v1165
        %v1170 = vsel %vm1169, 1, 0
        %v1171 = vadd.s32 %v1161, %v1165
        %v1172 = vadd.s32 %v1164, %v1170
        %vm1173 = vc.u32 %v1171, %v1167
        %v1174 = vsel %vm1173, 1, 0
        %v1175 = vadd.s32 %v1171, %v1167
        %v1176 = vadd.s32 %v1172, %v1174
        %v1177 = vadd.s32 %v1176, %v1166
        %v1178 = vadd.s32 %v1177, %v1168
        %v1179 = vmul.u32 %v1134, %v1125
        %v1180 = vadd.s32 %v1156, %v1175
        %vm1181 = vc.u32 %v1156, %v1175
        %v1182 = vadd.s32 %v1178, 1
        %v1183 = vsel %vm1181, %v1182, %v1178
        %v1184 = vadd.s32 %v1179, %v1183
        %v1185 = vadd.s32 %v1184, 536870912
        %v1186 = vshrl.u32 %v1185, 30
        %v1187 = vshll.u32 %v1186, 30
        %v1188 = vsub.s32 %v1184, %v1187
        %vm1189 = vcmp.lt.s32.totalorder %v1188, 0
        %v1190 = vsub.s32 0, %v1188
        %v1191 = vsel %vm1189, %v1190, %v1188
        %v1192 = vclz %v1191
        %v1193 = vsub.s32 %v1192, 2
        %vm1194 = vcmp.gt.s32.totalorder 0, %v1193
        %v1195 = vsel %vm1194, 0, %v1193
        %v1196 = vsub.s32 32, %v1195
        %v1197 = vshll.u32 %v1188, %v1195
        %v1198 = vshrl.u32 %v1180, %v1196
        %v1199 = vor.u32 %v1197, %v1198
        %v1200 = vsub.s32 4294967266, %v1195
        %v1201 = vadd.s32 %v1200, 127
        %v1202 = vshll.u32 %v1201, 23
        %v1203 = vor.u32 4788187, %v1202
        %v1204 = vand.u32 2147483647, %v1203
        %v1206 = vcvt.s32.f32 %v1199
        %v1207 = vmul.f32 %v1206, %v1204
        %v1208 = vxor.u32 %v1207, 2147483648
        %v1209 = vsel %vm1088, %v1208, %v1207
        %v1210 = vsub.s32 4, %v1186
        %v1211 = vsel %vm1088, %v1210, %v1186
        %v1212 = vsel %vm1087, %v1085, %v1209
        %v1213 = vsel %vm1087, 0, %v1211
        %v1214 = vmul.f32 %v1212, %v1212
        %v1215 = vmul.f32 %v1214, -0.001358992
        %v1216 = vadd.f32 %v1215, 0.041655596
        %v1217 = vmul.f32 %v1214, %v1216
        %v1218 = vadd.f32 %v1217, -0.4999988
        %v1219 = vmul.f32 %v1214, %v1218
        %v1220 = vadd.f32 1.0, %v1219
        %v1221 = vmul.f32 %v1212, %v1212
        %v1222 = vmul.f32 %v1221, -0.00019511016
        %v1223 = vadd.f32 %v1222, 0.008332121
        %v1224 = vmul.f32 %v1221, %v1223
        %v1225 = vadd.f32 %v1224, -0.16666654
        %v1226 = vmul.f32 %v1221, %v1225
        %v1227 = vadd.f32 %v1226, 1.0
        %v1228 = vmul.f32 %v1227, %v1212
        %vm1229 = vweird.f32 %v1085
        %v1230 = vadd.s32 %v1213, 3
        %v1231 = vand.u32 %v1230, 3
        %vm1232 = vcmp.lt.s32.totalorder %v1231, 2
        %vm1233 = vcmp.eq.s32.totalorder %v1231, 0
        %v1234 = vxor.u32 %v1228, 2147483648
        %v1235 = vsel %vm1233, %v1220, %v1234
        %vm1236 = vcmp.eq.s32.totalorder %v1231, 2
        %v1237 = vxor.u32 %v1220, 2147483648
        %v1238 = vsel %vm1236, %v1237, %v1228
        %v1239 = vsel %vm1232, %v1235, %v1238
        %v1240 = vsel %vm1229, nan, %v1239
        %s1241 = scalar_lea.vmem %s129, 24 [#allocation4]
        %1242 = vst [vmem:[%s1241] sm:$0xff] %v1240
        %v1243 = vand.u32 2147483647, %v1085
        %vm1244 = vcmp.le.f32.partialorder %v1243, 0.7853982
        %vm1245 = vcmp.lt.s32.totalorder %v1085, 0
        %v1246 = vand.u32 %v1085, 2139095040
        %v1247 = vshrl.u32 %v1246, 23
        %v1248 = vsub.s32 %v1247, 127
        %v1249 = vand.u32 2147483647, %v1085
        %v1250 = vand.u32 %v1249, 8388607
        %v1251 = vor.u32 %v1250, 8388608
        %v1252 = vsub.s32 0, %v1251
        %v1253 = vadd.s32 %v1248, 1
        %vm1254 = vcmp.gt.s32.totalorder %v1253, 0
        %v1255 = vsel %vm1254, %v1253, 0
        %v1256 = vshrl.u32 %v1255, 5
        %v1257 = vand.u32 %v1255, 31
        %v1258 = vsub.s32 32, %v1257
        %v1259 = vshrl.u32 683565275, %v1258
        %v1260 = vshll.u32 683565275, %v1257
        %v1261 = vshrl.u32 2475754826, %v1258
        %v1262 = vor.u32 %v1260, %v1261
        %v1263 = vshll.u32 2475754826, %v1257
        %v1264 = vshrl.u32 2131351028, %v1258
        %v1265 = vor.u32 %v1263, %v1264
        %v1266 = vshll.u32 2131351028, %v1257
        %v1267 = vshrl.u32 2102212464, %v1258
        %v1268 = vor.u32 %v1266, %v1267
        %v1269 = vshll.u32 2102212464, %v1257
        %v1270 = vshrl.u32 920167782, %v1258
        %v1271 = vor.u32 %v1269, %v1270
        %v1272 = vshll.u32 920167782, %v1257
        %v1273 = vshrl.u32 1326507024, %v1258
        %v1274 = vor.u32 %v1272, %v1273
        %vm1275 = vcmp.lt.s32.totalorder %v1256, 1
        %vm1276 = vcmp.lt.s32.totalorder %v1256, 2
        %vm1277 = vcmp.lt.s32.totalorder %v1256, 3
        %vm1278 = vcmp.lt.s32.totalorder %v1256, 4
        %v1279 = vsel %vm1275, %v1259, %v1262
        %v1280 = vsel %vm1278, %v1268, 2102212464
        %v1281 = vsel %vm1277, %v1265, %v1280
        %v1282 = vsel %vm1276, %v1279, %v1281
        %v1283 = vsel %vm1275, %v1262, %v1265
        %v1284 = vsel %vm1278, %v1271, 920167782
        %v1285 = vsel %vm1277, %v1268, %v1284
        %v1286 = vsel %vm1276, %v1283, %v1285
        %v1287 = vsel %vm1275, %v1265, %v1268
        %v1288 = vsel %vm1278, %v1274, 1326507024
        %v1289 = vsel %vm1277, %v1271, %v1288
        %v1290 = vsel %vm1276, %v1287, %v1289
        %v1291 = vshll.u32 %v1251, 8
        %v1292 = vand.u32 %v1291, 65535
        %v1293 = vshrl.u32 %v1291, 16
        %v1294 = vand.u32 %v1290, 65535
        %v1295 = vshrl.u32 %v1290, 16
        %v1296 = vmul.u32 %v1292, %v1294
        %v1297 = vmul.u32 %v1292, %v1295
        %v1298 = vmul.u32 %v1293, %v1294
        %v1299 = vmul.u32 %v1293, %v1295
        %v1300 = vshll.u32 %v1297, 16
        %v1301 = vshrl.u32 %v1297, 16
        %v1302 = vshll.u32 %v1298, 16
        %v1303 = vshrl.u32 %v1298, 16
        %vm1304 = vc.u32 %v1296, %v1300
        %v1305 = vsel %vm1304, 1, 0
        %v1306 = vadd.s32 %v1296, %v1300
        %v1307 = vadd.s32 %v1299, %v1305
        %vm1308 = vc.u32 %v1306, %v1302
        %v1309 = vsel %vm1308, 1, 0
        %v1310 = vadd.s32 %v1306, %v1302
        %v1311 = vadd.s32 %v1307, %v1309
        %v1312 = vadd.s32 %v1311, %v1301
        %v1313 = vadd.s32 %v1312, %v1303
        %v1314 = vand.u32 %v1291, 65535
        %v1315 = vshrl.u32 %v1291, 16
        %v1316 = vand.u32 %v1286, 65535
        %v1317 = vshrl.u32 %v1286, 16
        %v1318 = vmul.u32 %v1314, %v1316
        %v1319 = vmul.u32 %v1314, %v1317
        %v1320 = vmul.u32 %v1315, %v1316
        %v1321 = vmul.u32 %v1315, %v1317
        %v1322 = vshll.u32 %v1319, 16
        %v1323 = vshrl.u32 %v1319, 16
        %v1324 = vshll.u32 %v1320, 16
        %v1325 = vshrl.u32 %v1320, 16
        %vm1326 = vc.u32 %v1318, %v1322
        %v1327 = vsel %vm1326, 1, 0
        %v1328 = vadd.s32 %v1318, %v1322
        %v1329 = vadd.s32 %v1321, %v1327
        %vm1330 = vc.u32 %v1328, %v1324
        %v1331 = vsel %vm1330, 1, 0
        %v1332 = vadd.s32 %v1328, %v1324
        %v1333 = vadd.s32 %v1329, %v1331
        %v1334 = vadd.s32 %v1333, %v1323
        %v1335 = vadd.s32 %v1334, %v1325
        %v1336 = vmul.u32 %v1291, %v1282
        %v1337 = vadd.s32 %v1313, %v1332
        %vm1338 = vc.u32 %v1313, %v1332
        %v1339 = vadd.s32 %v1335, 1
        %v1340 = vsel %vm1338, %v1339, %v1335
        %v1341 = vadd.s32 %v1336, %v1340
        %v1342 = vadd.s32 %v1341, 536870912
        %v1343 = vshrl.u32 %v1342, 30
        %v1344 = vshll.u32 %v1343, 30
        %v1345 = vsub.s32 %v1341, %v1344
        %vm1346 = vcmp.lt.s32.totalorder %v1345, 0
        %v1347 = vsub.s32 0, %v1345
        %v1348 = vsel %vm1346, %v1347, %v1345
        %v1349 = vclz %v1348
        %v1350 = vsub.s32 %v1349, 2
        %vm1351 = vcmp.gt.s32.totalorder 0, %v1350
        %v1352 = vsel %vm1351, 0, %v1350
        %v1353 = vsub.s32 32, %v1352
        %v1354 = vshll.u32 %v1345, %v1352
        %v1355 = vshrl.u32 %v1337, %v1353
        %v1356 = vor.u32 %v1354, %v1355
        %v1357 = vsub.s32 4294967266, %v1352
        %v1358 = vadd.s32 %v1357, 127
        %v1359 = vshll.u32 %v1358, 23
        %v1360 = vor.u32 4788187, %v1359
        %v1361 = vand.u32 2147483647, %v1360
        %v1363 = vcvt.s32.f32 %v1356
        %v1364 = vmul.f32 %v1363, %v1361
        %v1365 = vxor.u32 %v1364, 2147483648
        %v1366 = vsel %vm1245, %v1365, %v1364
        %v1367 = vsub.s32 4, %v1343
        %v1368 = vsel %vm1245, %v1367, %v1343
        %v1369 = vsel %vm1244, %v1085, %v1366
        %v1370 = vsel %vm1244, 0, %v1368
        %v1371 = vmul.f32 %v1369, %v1369
        %v1372 = vmul.f32 %v1371, -0.001358992
        %v1373 = vadd.f32 %v1372, 0.041655596
        %v1374 = vmul.f32 %v1371, %v1373
        %v1375 = vadd.f32 %v1374, -0.4999988
        %v1376 = vmul.f32 %v1371, %v1375
        %v1377 = vadd.f32 1.0, %v1376
        %v1378 = vmul.f32 %v1369, %v1369
        %v1379 = vmul.f32 %v1378, -0.00019511016
        %v1380 = vadd.f32 %v1379, 0.008332121
        %v1381 = vmul.f32 %v1378, %v1380
        %v1382 = vadd.f32 %v1381, -0.16666654
        %v1383 = vmul.f32 %v1378, %v1382
        %v1384 = vadd.f32 %v1383, 1.0
        %v1385 = vmul.f32 %v1384, %v1369
        %vm1386 = vweird.f32 %v1085
        %v1387 = vand.u32 %v1370, 3
        %vm1388 = vcmp.lt.s32.totalorder %v1387, 2
        %vm1389 = vcmp.eq.s32.totalorder %v1387, 0
        %v1390 = vxor.u32 %v1385, 2147483648
        %v1391 = vsel %vm1389, %v1377, %v1390
        %vm1392 = vcmp.eq.s32.totalorder %v1387, 2
        %v1393 = vxor.u32 %v1377, 2147483648
        %v1394 = vsel %vm1392, %v1393, %v1385
        %v1395 = vsel %vm1388, %v1391, %v1394
        %v1396 = vsel %vm1386, nan, %v1395
        %s1397 = scalar_lea.vmem %s129, 72 [#allocation4]
        %1398 = vst [vmem:[%s1397] sm:$0xff] %v1396
        %v1399 = vmul.f32 %v143, 107.23303
        %v1400 = vand.u32 2147483647, %v1399
        %vm1401 = vcmp.le.f32.partialorder %v1400, 0.7853982
        %vm1402 = vcmp.lt.s32.totalorder %v1399, 0
        %v1403 = vand.u32 %v1399, 2139095040
        %v1404 = vshrl.u32 %v1403, 23
        %v1405 = vsub.s32 %v1404, 127
        %v1406 = vand.u32 2147483647, %v1399
        %v1407 = vand.u32 %v1406, 8388607
        %v1408 = vor.u32 %v1407, 8388608
        %v1409 = vsub.s32 0, %v1408
        %v1410 = vadd.s32 %v1405, 1
        %vm1411 = vcmp.gt.s32.totalorder %v1410, 0
        %v1412 = vsel %vm1411, %v1410, 0
        %v1413 = vshrl.u32 %v1412, 5
        %v1414 = vand.u32 %v1412, 31
        %v1415 = vsub.s32 32, %v1414
        %v1416 = vshrl.u32 683565275, %v1415
        %v1417 = vshll.u32 683565275, %v1414
        %v1418 = vshrl.u32 2475754826, %v1415
        %v1419 = vor.u32 %v1417, %v1418
        %v1420 = vshll.u32 2475754826, %v1414
        %v1421 = vshrl.u32 2131351028, %v1415
        %v1422 = vor.u32 %v1420, %v1421
        %v1423 = vshll.u32 2131351028, %v1414
        %v1424 = vshrl.u32 2102212464, %v1415
        %v1425 = vor.u32 %v1423, %v1424
        %v1426 = vshll.u32 2102212464, %v1414
        %v1427 = vshrl.u32 920167782, %v1415
        %v1428 = vor.u32 %v1426, %v1427
        %v1429 = vshll.u32 920167782, %v1414
        %v1430 = vshrl.u32 1326507024, %v1415
        %v1431 = vor.u32 %v1429, %v1430
        %vm1432 = vcmp.lt.s32.totalorder %v1413, 1
        %vm1433 = vcmp.lt.s32.totalorder %v1413, 2
        %vm1434 = vcmp.lt.s32.totalorder %v1413, 3
        %vm1435 = vcmp.lt.s32.totalorder %v1413, 4
        %v1436 = vsel %vm1432, %v1416, %v1419
        %v1437 = vsel %vm1435, %v1425, 2102212464
        %v1438 = vsel %vm1434, %v1422, %v1437
        %v1439 = vsel %vm1433, %v1436, %v1438
        %v1440 = vsel %vm1432, %v1419, %v1422
        %v1441 = vsel %vm1435, %v1428, 920167782
        %v1442 = vsel %vm1434, %v1425, %v1441
        %v1443 = vsel %vm1433, %v1440, %v1442
        %v1444 = vsel %vm1432, %v1422, %v1425
        %v1445 = vsel %vm1435, %v1431, 1326507024
        %v1446 = vsel %vm1434, %v1428, %v1445
        %v1447 = vsel %vm1433, %v1444, %v1446
        %v1448 = vshll.u32 %v1408, 8
        %v1449 = vand.u32 %v1448, 65535
        %v1450 = vshrl.u32 %v1448, 16
        %v1451 = vand.u32 %v1447, 65535
        %v1452 = vshrl.u32 %v1447, 16
        %v1453 = vmul.u32 %v1449, %v1451
        %v1454 = vmul.u32 %v1449, %v1452
        %v1455 = vmul.u32 %v1450, %v1451
        %v1456 = vmul.u32 %v1450, %v1452
        %v1457 = vshll.u32 %v1454, 16
        %v1458 = vshrl.u32 %v1454, 16
        %v1459 = vshll.u32 %v1455, 16
        %v1460 = vshrl.u32 %v1455, 16
        %vm1461 = vc.u32 %v1453, %v1457
        %v1462 = vsel %vm1461, 1, 0
        %v1463 = vadd.s32 %v1453, %v1457
        %v1464 = vadd.s32 %v1456, %v1462
        %vm1465 = vc.u32 %v1463, %v1459
        %v1466 = vsel %vm1465, 1, 0
        %v1467 = vadd.s32 %v1463, %v1459
        %v1468 = vadd.s32 %v1464, %v1466
        %v1469 = vadd.s32 %v1468, %v1458
        %v1470 = vadd.s32 %v1469, %v1460
        %v1471 = vand.u32 %v1448, 65535
        %v1472 = vshrl.u32 %v1448, 16
        %v1473 = vand.u32 %v1443, 65535
        %v1474 = vshrl.u32 %v1443, 16
        %v1475 = vmul.u32 %v1471, %v1473
        %v1476 = vmul.u32 %v1471, %v1474
        %v1477 = vmul.u32 %v1472, %v1473
        %v1478 = vmul.u32 %v1472, %v1474
        %v1479 = vshll.u32 %v1476, 16
        %v1480 = vshrl.u32 %v1476, 16
        %v1481 = vshll.u32 %v1477, 16
        %v1482 = vshrl.u32 %v1477, 16
        %vm1483 = vc.u32 %v1475, %v1479
        %v1484 = vsel %vm1483, 1, 0
        %v1485 = vadd.s32 %v1475, %v1479
        %v1486 = vadd.s32 %v1478, %v1484
        %vm1487 = vc.u32 %v1485, %v1481
        %v1488 = vsel %vm1487, 1, 0
        %v1489 = vadd.s32 %v1485, %v1481
        %v1490 = vadd.s32 %v1486, %v1488
        %v1491 = vadd.s32 %v1490, %v1480
        %v1492 = vadd.s32 %v1491, %v1482
        %v1493 = vmul.u32 %v1448, %v1439
        %v1494 = vadd.s32 %v1470, %v1489
        %vm1495 = vc.u32 %v1470, %v1489
        %v1496 = vadd.s32 %v1492, 1
        %v1497 = vsel %vm1495, %v1496, %v1492
        %v1498 = vadd.s32 %v1493, %v1497
        %v1499 = vadd.s32 %v1498, 536870912
        %v1500 = vshrl.u32 %v1499, 30
        %v1501 = vshll.u32 %v1500, 30
        %v1502 = vsub.s32 %v1498, %v1501
        %vm1503 = vcmp.lt.s32.totalorder %v1502, 0
        %v1504 = vsub.s32 0, %v1502
        %v1505 = vsel %vm1503, %v1504, %v1502
        %v1506 = vclz %v1505
        %v1507 = vsub.s32 %v1506, 2
        %vm1508 = vcmp.gt.s32.totalorder 0, %v1507
        %v1509 = vsel %vm1508, 0, %v1507
        %v1510 = vsub.s32 32, %v1509
        %v1511 = vshll.u32 %v1502, %v1509
        %v1512 = vshrl.u32 %v1494, %v1510
        %v1513 = vor.u32 %v1511, %v1512
        %v1514 = vsub.s32 4294967266, %v1509
        %v1515 = vadd.s32 %v1514, 127
        %v1516 = vshll.u32 %v1515, 23
        %v1517 = vor.u32 4788187, %v1516
        %v1518 = vand.u32 2147483647, %v1517
        %v1520 = vcvt.s32.f32 %v1513
        %v1521 = vmul.f32 %v1520, %v1518
        %v1522 = vxor.u32 %v1521, 2147483648
        %v1523 = vsel %vm1402, %v1522, %v1521
        %v1524 = vsub.s32 4, %v1500
        %v1525 = vsel %vm1402, %v1524, %v1500
        %v1526 = vsel %vm1401, %v1399, %v1523
        %v1527 = vsel %vm1401, 0, %v1525
        %v1528 = vmul.f32 %v1526, %v1526
        %v1529 = vmul.f32 %v1528, -0.001358992
        %v1530 = vadd.f32 %v1529, 0.041655596
        %v1531 = vmul.f32 %v1528, %v1530
        %v1532 = vadd.f32 %v1531, -0.4999988
        %v1533 = vmul.f32 %v1528, %v1532
        %v1534 = vadd.f32 1.0, %v1533
        %v1535 = vmul.f32 %v1526, %v1526
        %v1536 = vmul.f32 %v1535, -0.00019511016
        %v1537 = vadd.f32 %v1536, 0.008332121
        %v1538 = vmul.f32 %v1535, %v1537
        %v1539 = vadd.f32 %v1538, -0.16666654
        %v1540 = vmul.f32 %v1535, %v1539
        %v1541 = vadd.f32 %v1540, 1.0
        %v1542 = vmul.f32 %v1541, %v1526
        %vm1543 = vweird.f32 %v1399
        %v1544 = vadd.s32 %v1527, 3
        %v1545 = vand.u32 %v1544, 3
        %vm1546 = vcmp.lt.s32.totalorder %v1545, 2
        %vm1547 = vcmp.eq.s32.totalorder %v1545, 0
        %v1548 = vxor.u32 %v1542, 2147483648
        %v1549 = vsel %vm1547, %v1534, %v1548
        %vm1550 = vcmp.eq.s32.totalorder %v1545, 2
        %v1551 = vxor.u32 %v1534, 2147483648
        %v1552 = vsel %vm1550, %v1551, %v1542
        %v1553 = vsel %vm1546, %v1549, %v1552
        %v1554 = vsel %vm1543, nan, %v1553
        %s1555 = scalar_lea.vmem %s129, 32 [#allocation4]
        %1556 = vst [vmem:[%s1555] sm:$0xff] %v1554
        %v1557 = vand.u32 2147483647, %v1399
        %vm1558 = vcmp.le.f32.partialorder %v1557, 0.7853982
        %vm1559 = vcmp.lt.s32.totalorder %v1399, 0
        %v1560 = vand.u32 %v1399, 2139095040
        %v1561 = vshrl.u32 %v1560, 23
        %v1562 = vsub.s32 %v1561, 127
        %v1563 = vand.u32 2147483647, %v1399
        %v1564 = vand.u32 %v1563, 8388607
        %v1565 = vor.u32 %v1564, 8388608
        %v1566 = vsub.s32 0, %v1565
        %v1567 = vadd.s32 %v1562, 1
        %vm1568 = vcmp.gt.s32.totalorder %v1567, 0
        %v1569 = vsel %vm1568, %v1567, 0
        %v1570 = vshrl.u32 %v1569, 5
        %v1571 = vand.u32 %v1569, 31
        %v1572 = vsub.s32 32, %v1571
        %v1573 = vshrl.u32 683565275, %v1572
        %v1574 = vshll.u32 683565275, %v1571
        %v1575 = vshrl.u32 2475754826, %v1572
        %v1576 = vor.u32 %v1574, %v1575
        %v1577 = vshll.u32 2475754826, %v1571
        %v1578 = vshrl.u32 2131351028, %v1572
        %v1579 = vor.u32 %v1577, %v1578
        %v1580 = vshll.u32 2131351028, %v1571
        %v1581 = vshrl.u32 2102212464, %v1572
        %v1582 = vor.u32 %v1580, %v1581
        %v1583 = vshll.u32 2102212464, %v1571
        %v1584 = vshrl.u32 920167782, %v1572
        %v1585 = vor.u32 %v1583, %v1584
        %v1586 = vshll.u32 920167782, %v1571
        %v1587 = vshrl.u32 1326507024, %v1572
        %v1588 = vor.u32 %v1586, %v1587
        %vm1589 = vcmp.lt.s32.totalorder %v1570, 1
        %vm1590 = vcmp.lt.s32.totalorder %v1570, 2
        %vm1591 = vcmp.lt.s32.totalorder %v1570, 3
        %vm1592 = vcmp.lt.s32.totalorder %v1570, 4
        %v1593 = vsel %vm1589, %v1573, %v1576
        %v1594 = vsel %vm1592, %v1582, 2102212464
        %v1595 = vsel %vm1591, %v1579, %v1594
        %v1596 = vsel %vm1590, %v1593, %v1595
        %v1597 = vsel %vm1589, %v1576, %v1579
        %v1598 = vsel %vm1592, %v1585, 920167782
        %v1599 = vsel %vm1591, %v1582, %v1598
        %v1600 = vsel %vm1590, %v1597, %v1599
        %v1601 = vsel %vm1589, %v1579, %v1582
        %v1602 = vsel %vm1592, %v1588, 1326507024
        %v1603 = vsel %vm1591, %v1585, %v1602
        %v1604 = vsel %vm1590, %v1601, %v1603
        %v1605 = vshll.u32 %v1565, 8
        %v1606 = vand.u32 %v1605, 65535
        %v1607 = vshrl.u32 %v1605, 16
        %v1608 = vand.u32 %v1604, 65535
        %v1609 = vshrl.u32 %v1604, 16
        %v1610 = vmul.u32 %v1606, %v1608
        %v1611 = vmul.u32 %v1606, %v1609
        %v1612 = vmul.u32 %v1607, %v1608
        %v1613 = vmul.u32 %v1607, %v1609
        %v1614 = vshll.u32 %v1611, 16
        %v1615 = vshrl.u32 %v1611, 16
        %v1616 = vshll.u32 %v1612, 16
        %v1617 = vshrl.u32 %v1612, 16
        %vm1618 = vc.u32 %v1610, %v1614
        %v1619 = vsel %vm1618, 1, 0
        %v1620 = vadd.s32 %v1610, %v1614
        %v1621 = vadd.s32 %v1613, %v1619
        %vm1622 = vc.u32 %v1620, %v1616
        %v1623 = vsel %vm1622, 1, 0
        %v1624 = vadd.s32 %v1620, %v1616
        %v1625 = vadd.s32 %v1621, %v1623
        %v1626 = vadd.s32 %v1625, %v1615
        %v1627 = vadd.s32 %v1626, %v1617
        %v1628 = vand.u32 %v1605, 65535
        %v1629 = vshrl.u32 %v1605, 16
        %v1630 = vand.u32 %v1600, 65535
        %v1631 = vshrl.u32 %v1600, 16
        %v1632 = vmul.u32 %v1628, %v1630
        %v1633 = vmul.u32 %v1628, %v1631
        %v1634 = vmul.u32 %v1629, %v1630
        %v1635 = vmul.u32 %v1629, %v1631
        %v1636 = vshll.u32 %v1633, 16
        %v1637 = vshrl.u32 %v1633, 16
        %v1638 = vshll.u32 %v1634, 16
        %v1639 = vshrl.u32 %v1634, 16
        %vm1640 = vc.u32 %v1632, %v1636
        %v1641 = vsel %vm1640, 1, 0
        %v1642 = vadd.s32 %v1632, %v1636
        %v1643 = vadd.s32 %v1635, %v1641
        %vm1644 = vc.u32 %v1642, %v1638
        %v1645 = vsel %vm1644, 1, 0
        %v1646 = vadd.s32 %v1642, %v1638
        %v1647 = vadd.s32 %v1643, %v1645
        %v1648 = vadd.s32 %v1647, %v1637
        %v1649 = vadd.s32 %v1648, %v1639
        %v1650 = vmul.u32 %v1605, %v1596
        %v1651 = vadd.s32 %v1627, %v1646
        %vm1652 = vc.u32 %v1627, %v1646
        %v1653 = vadd.s32 %v1649, 1
        %v1654 = vsel %vm1652, %v1653, %v1649
        %v1655 = vadd.s32 %v1650, %v1654
        %v1656 = vadd.s32 %v1655, 536870912
        %v1657 = vshrl.u32 %v1656, 30
        %v1658 = vshll.u32 %v1657, 30
        %v1659 = vsub.s32 %v1655, %v1658
        %vm1660 = vcmp.lt.s32.totalorder %v1659, 0
        %v1661 = vsub.s32 0, %v1659
        %v1662 = vsel %vm1660, %v1661, %v1659
        %v1663 = vclz %v1662
        %v1664 = vsub.s32 %v1663, 2
        %vm1665 = vcmp.gt.s32.totalorder 0, %v1664
        %v1666 = vsel %vm1665, 0, %v1664
        %v1667 = vsub.s32 32, %v1666
        %v1668 = vshll.u32 %v1659, %v1666
        %v1669 = vshrl.u32 %v1651, %v1667
        %v1670 = vor.u32 %v1668, %v1669
        %v1671 = vsub.s32 4294967266, %v1666
        %v1672 = vadd.s32 %v1671, 127
        %v1673 = vshll.u32 %v1672, 23
        %v1674 = vor.u32 4788187, %v1673
        %v1675 = vand.u32 2147483647, %v1674
        %v1677 = vcvt.s32.f32 %v1670
        %v1678 = vmul.f32 %v1677, %v1675
        %v1679 = vxor.u32 %v1678, 2147483648
        %v1680 = vsel %vm1559, %v1679, %v1678
        %v1681 = vsub.s32 4, %v1657
        %v1682 = vsel %vm1559, %v1681, %v1657
        %v1683 = vsel %vm1558, %v1399, %v1680
        %v1684 = vsel %vm1558, 0, %v1682
        %v1685 = vmul.f32 %v1683, %v1683
        %v1686 = vmul.f32 %v1685, -0.001358992
        %v1687 = vadd.f32 %v1686, 0.041655596
        %v1688 = vmul.f32 %v1685, %v1687
        %v1689 = vadd.f32 %v1688, -0.4999988
        %v1690 = vmul.f32 %v1685, %v1689
        %v1691 = vadd.f32 1.0, %v1690
        %v1692 = vmul.f32 %v1683, %v1683
        %v1693 = vmul.f32 %v1692, -0.00019511016
        %v1694 = vadd.f32 %v1693, 0.008332121
        %v1695 = vmul.f32 %v1692, %v1694
        %v1696 = vadd.f32 %v1695, -0.16666654
        %v1697 = vmul.f32 %v1692, %v1696
        %v1698 = vadd.f32 %v1697, 1.0
        %v1699 = vmul.f32 %v1698, %v1683
        %vm1700 = vweird.f32 %v1399
        %v1701 = vand.u32 %v1684, 3
        %vm1702 = vcmp.lt.s32.totalorder %v1701, 2
        %vm1703 = vcmp.eq.s32.totalorder %v1701, 0
        %v1704 = vxor.u32 %v1699, 2147483648
        %v1705 = vsel %vm1703, %v1691, %v1704
        %vm1706 = vcmp.eq.s32.totalorder %v1701, 2
        %v1707 = vxor.u32 %v1691, 2147483648
        %v1708 = vsel %vm1706, %v1707, %v1699
        %v1709 = vsel %vm1702, %v1705, %v1708
        %v1710 = vsel %vm1700, nan, %v1709
        %s1711 = scalar_lea.vmem %s129, 80 [#allocation4]
        %1712 = vst [vmem:[%s1711] sm:$0xff] %v1710
        %v1713 = vmul.f32 %v143, 428.93213
        %v1714 = vand.u32 2147483647, %v1713
        %vm1715 = vcmp.le.f32.partialorder %v1714, 0.7853982
        %vm1716 = vcmp.lt.s32.totalorder %v1713, 0
        %v1717 = vand.u32 %v1713, 2139095040
        %v1718 = vshrl.u32 %v1717, 23
        %v1719 = vsub.s32 %v1718, 127
        %v1720 = vand.u32 2147483647, %v1713
        %v1721 = vand.u32 %v1720, 8388607
        %v1722 = vor.u32 %v1721, 8388608
        %v1723 = vsub.s32 0, %v1722
        %v1724 = vadd.s32 %v1719, 1
        %vm1725 = vcmp.gt.s32.totalorder %v1724, 0
        %v1726 = vsel %vm1725, %v1724, 0
        %v1727 = vshrl.u32 %v1726, 5
        %v1728 = vand.u32 %v1726, 31
        %v1729 = vsub.s32 32, %v1728
        %v1730 = vshrl.u32 683565275, %v1729
        %v1731 = vshll.u32 683565275, %v1728
        %v1732 = vshrl.u32 2475754826, %v1729
        %v1733 = vor.u32 %v1731, %v1732
        %v1734 = vshll.u32 2475754826, %v1728
        %v1735 = vshrl.u32 2131351028, %v1729
        %v1736 = vor.u32 %v1734, %v1735
        %v1737 = vshll.u32 2131351028, %v1728
        %v1738 = vshrl.u32 2102212464, %v1729
        %v1739 = vor.u32 %v1737, %v1738
        %v1740 = vshll.u32 2102212464, %v1728
        %v1741 = vshrl.u32 920167782, %v1729
        %v1742 = vor.u32 %v1740, %v1741
        %v1743 = vshll.u32 920167782, %v1728
        %v1744 = vshrl.u32 1326507024, %v1729
        %v1745 = vor.u32 %v1743, %v1744
        %vm1746 = vcmp.lt.s32.totalorder %v1727, 1
        %vm1747 = vcmp.lt.s32.totalorder %v1727, 2
        %vm1748 = vcmp.lt.s32.totalorder %v1727, 3
        %vm1749 = vcmp.lt.s32.totalorder %v1727, 4
        %v1750 = vsel %vm1746, %v1730, %v1733
        %v1751 = vsel %vm1749, %v1739, 2102212464
        %v1752 = vsel %vm1748, %v1736, %v1751
        %v1753 = vsel %vm1747, %v1750, %v1752
        %v1754 = vsel %vm1746, %v1733, %v1736
        %v1755 = vsel %vm1749, %v1742, 920167782
        %v1756 = vsel %vm1748, %v1739, %v1755
        %v1757 = vsel %vm1747, %v1754, %v1756
        %v1758 = vsel %vm1746, %v1736, %v1739
        %v1759 = vsel %vm1749, %v1745, 1326507024
        %v1760 = vsel %vm1748, %v1742, %v1759
        %v1761 = vsel %vm1747, %v1758, %v1760
        %v1762 = vshll.u32 %v1722, 8
        %v1763 = vand.u32 %v1762, 65535
        %v1764 = vshrl.u32 %v1762, 16
        %v1765 = vand.u32 %v1761, 65535
        %v1766 = vshrl.u32 %v1761, 16
        %v1767 = vmul.u32 %v1763, %v1765
        %v1768 = vmul.u32 %v1763, %v1766
        %v1769 = vmul.u32 %v1764, %v1765
        %v1770 = vmul.u32 %v1764, %v1766
        %v1771 = vshll.u32 %v1768, 16
        %v1772 = vshrl.u32 %v1768, 16
        %v1773 = vshll.u32 %v1769, 16
        %v1774 = vshrl.u32 %v1769, 16
        %vm1775 = vc.u32 %v1767, %v1771
        %v1776 = vsel %vm1775, 1, 0
        %v1777 = vadd.s32 %v1767, %v1771
        %v1778 = vadd.s32 %v1770, %v1776
        %vm1779 = vc.u32 %v1777, %v1773
        %v1780 = vsel %vm1779, 1, 0
        %v1781 = vadd.s32 %v1777, %v1773
        %v1782 = vadd.s32 %v1778, %v1780
        %v1783 = vadd.s32 %v1782, %v1772
        %v1784 = vadd.s32 %v1783, %v1774
        %v1785 = vand.u32 %v1762, 65535
        %v1786 = vshrl.u32 %v1762, 16
        %v1787 = vand.u32 %v1757, 65535
        %v1788 = vshrl.u32 %v1757, 16
        %v1789 = vmul.u32 %v1785, %v1787
        %v1790 = vmul.u32 %v1785, %v1788
        %v1791 = vmul.u32 %v1786, %v1787
        %v1792 = vmul.u32 %v1786, %v1788
        %v1793 = vshll.u32 %v1790, 16
        %v1794 = vshrl.u32 %v1790, 16
        %v1795 = vshll.u32 %v1791, 16
        %v1796 = vshrl.u32 %v1791, 16
        %vm1797 = vc.u32 %v1789, %v1793
        %v1798 = vsel %vm1797, 1, 0
        %v1799 = vadd.s32 %v1789, %v1793
        %v1800 = vadd.s32 %v1792, %v1798
        %vm1801 = vc.u32 %v1799, %v1795
        %v1802 = vsel %vm1801, 1, 0
        %v1803 = vadd.s32 %v1799, %v1795
        %v1804 = vadd.s32 %v1800, %v1802
        %v1805 = vadd.s32 %v1804, %v1794
        %v1806 = vadd.s32 %v1805, %v1796
        %v1807 = vmul.u32 %v1762, %v1753
        %v1808 = vadd.s32 %v1784, %v1803
        %vm1809 = vc.u32 %v1784, %v1803
        %v1810 = vadd.s32 %v1806, 1
        %v1811 = vsel %vm1809, %v1810, %v1806
        %v1812 = vadd.s32 %v1807, %v1811
        %v1813 = vadd.s32 %v1812, 536870912
        %v1814 = vshrl.u32 %v1813, 30
        %v1815 = vshll.u32 %v1814, 30
        %v1816 = vsub.s32 %v1812, %v1815
        %vm1817 = vcmp.lt.s32.totalorder %v1816, 0
        %v1818 = vsub.s32 0, %v1816
        %v1819 = vsel %vm1817, %v1818, %v1816
        %v1820 = vclz %v1819
        %v1821 = vsub.s32 %v1820, 2
        %vm1822 = vcmp.gt.s32.totalorder 0, %v1821
        %v1823 = vsel %vm1822, 0, %v1821
        %v1824 = vsub.s32 32, %v1823
        %v1825 = vshll.u32 %v1816, %v1823
        %v1826 = vshrl.u32 %v1808, %v1824
        %v1827 = vor.u32 %v1825, %v1826
        %v1828 = vsub.s32 4294967266, %v1823
        %v1829 = vadd.s32 %v1828, 127
        %v1830 = vshll.u32 %v1829, 23
        %v1831 = vor.u32 4788187, %v1830
        %v1832 = vand.u32 2147483647, %v1831
        %v1834 = vcvt.s32.f32 %v1827
        %v1835 = vmul.f32 %v1834, %v1832
        %v1836 = vxor.u32 %v1835, 2147483648
        %v1837 = vsel %vm1716, %v1836, %v1835
        %v1838 = vsub.s32 4, %v1814
        %v1839 = vsel %vm1716, %v1838, %v1814
        %v1840 = vsel %vm1715, %v1713, %v1837
        %v1841 = vsel %vm1715, 0, %v1839
        %v1842 = vmul.f32 %v1840, %v1840
        %v1843 = vmul.f32 %v1842, -0.001358992
        %v1844 = vadd.f32 %v1843, 0.041655596
        %v1845 = vmul.f32 %v1842, %v1844
        %v1846 = vadd.f32 %v1845, -0.4999988
        %v1847 = vmul.f32 %v1842, %v1846
        %v1848 = vadd.f32 1.0, %v1847
        %v1849 = vmul.f32 %v1840, %v1840
        %v1850 = vmul.f32 %v1849, -0.00019511016
        %v1851 = vadd.f32 %v1850, 0.008332121
        %v1852 = vmul.f32 %v1849, %v1851
        %v1853 = vadd.f32 %v1852, -0.16666654
        %v1854 = vmul.f32 %v1849, %v1853
        %v1855 = vadd.f32 %v1854, 1.0
        %v1856 = vmul.f32 %v1855, %v1840
        %vm1857 = vweird.f32 %v1713
        %v1858 = vadd.s32 %v1841, 3
        %v1859 = vand.u32 %v1858, 3
        %vm1860 = vcmp.lt.s32.totalorder %v1859, 2
        %vm1861 = vcmp.eq.s32.totalorder %v1859, 0
        %v1862 = vxor.u32 %v1856, 2147483648
        %v1863 = vsel %vm1861, %v1848, %v1862
        %vm1864 = vcmp.eq.s32.totalorder %v1859, 2
        %v1865 = vxor.u32 %v1848, 2147483648
        %v1866 = vsel %vm1864, %v1865, %v1856
        %v1867 = vsel %vm1860, %v1863, %v1866
        %v1868 = vsel %vm1857, nan, %v1867
        %s1869 = scalar_lea.vmem %s129, 40 [#allocation4]
        %1870 = vst [vmem:[%s1869] sm:$0xff] %v1868
        %v1871 = vand.u32 2147483647, %v1713
        %vm1872 = vcmp.le.f32.partialorder %v1871, 0.7853982
        %vm1873 = vcmp.lt.s32.totalorder %v1713, 0
        %v1874 = vand.u32 %v1713, 2139095040
        %v1875 = vshrl.u32 %v1874, 23
        %v1876 = vsub.s32 %v1875, 127
        %v1877 = vand.u32 2147483647, %v1713
        %v1878 = vand.u32 %v1877, 8388607
        %v1879 = vor.u32 %v1878, 8388608
        %v1880 = vsub.s32 0, %v1879
        %v1881 = vadd.s32 %v1876, 1
        %vm1882 = vcmp.gt.s32.totalorder %v1881, 0
        %v1883 = vsel %vm1882, %v1881, 0
        %v1884 = vshrl.u32 %v1883, 5
        %v1885 = vand.u32 %v1883, 31
        %v1886 = vsub.s32 32, %v1885
        %v1887 = vshrl.u32 683565275, %v1886
        %v1888 = vshll.u32 683565275, %v1885
        %v1889 = vshrl.u32 2475754826, %v1886
        %v1890 = vor.u32 %v1888, %v1889
        %v1891 = vshll.u32 2475754826, %v1885
        %v1892 = vshrl.u32 2131351028, %v1886
        %v1893 = vor.u32 %v1891, %v1892
        %v1894 = vshll.u32 2131351028, %v1885
        %v1895 = vshrl.u32 2102212464, %v1886
        %v1896 = vor.u32 %v1894, %v1895
        %v1897 = vshll.u32 2102212464, %v1885
        %v1898 = vshrl.u32 920167782, %v1886
        %v1899 = vor.u32 %v1897, %v1898
        %v1900 = vshll.u32 920167782, %v1885
        %v1901 = vshrl.u32 1326507024, %v1886
        %v1902 = vor.u32 %v1900, %v1901
        %vm1903 = vcmp.lt.s32.totalorder %v1884, 1
        %vm1904 = vcmp.lt.s32.totalorder %v1884, 2
        %vm1905 = vcmp.lt.s32.totalorder %v1884, 3
        %vm1906 = vcmp.lt.s32.totalorder %v1884, 4
        %v1907 = vsel %vm1903, %v1887, %v1890
        %v1908 = vsel %vm1906, %v1896, 2102212464
        %v1909 = vsel %vm1905, %v1893, %v1908
        %v1910 = vsel %vm1904, %v1907, %v1909
        %v1911 = vsel %vm1903, %v1890, %v1893
        %v1912 = vsel %vm1906, %v1899, 920167782
        %v1913 = vsel %vm1905, %v1896, %v1912
        %v1914 = vsel %vm1904, %v1911, %v1913
        %v1915 = vsel %vm1903, %v1893, %v1896
        %v1916 = vsel %vm1906, %v1902, 1326507024
        %v1917 = vsel %vm1905, %v1899, %v1916
        %v1918 = vsel %vm1904, %v1915, %v1917
        %v1919 = vshll.u32 %v1879, 8
        %v1920 = vand.u32 %v1919, 65535
        %v1921 = vshrl.u32 %v1919, 16
        %v1922 = vand.u32 %v1918, 65535
        %v1923 = vshrl.u32 %v1918, 16
        %v1924 = vmul.u32 %v1920, %v1922
        %v1925 = vmul.u32 %v1920, %v1923
        %v1926 = vmul.u32 %v1921, %v1922
        %v1927 = vmul.u32 %v1921, %v1923
        %v1928 = vshll.u32 %v1925, 16
        %v1929 = vshrl.u32 %v1925, 16
        %v1930 = vshll.u32 %v1926, 16
        %v1931 = vshrl.u32 %v1926, 16
        %vm1932 = vc.u32 %v1924, %v1928
        %v1933 = vsel %vm1932, 1, 0
        %v1934 = vadd.s32 %v1924, %v1928
        %v1935 = vadd.s32 %v1927, %v1933
        %vm1936 = vc.u32 %v1934, %v1930
        %v1937 = vsel %vm1936, 1, 0
        %v1938 = vadd.s32 %v1934, %v1930
        %v1939 = vadd.s32 %v1935, %v1937
        %v1940 = vadd.s32 %v1939, %v1929
        %v1941 = vadd.s32 %v1940, %v1931
        %v1942 = vand.u32 %v1919, 65535
        %v1943 = vshrl.u32 %v1919, 16
        %v1944 = vand.u32 %v1914, 65535
        %v1945 = vshrl.u32 %v1914, 16
        %v1946 = vmul.u32 %v1942, %v1944
        %v1947 = vmul.u32 %v1942, %v1945
        %v1948 = vmul.u32 %v1943, %v1944
        %v1949 = vmul.u32 %v1943, %v1945
        %v1950 = vshll.u32 %v1947, 16
        %v1951 = vshrl.u32 %v1947, 16
        %v1952 = vshll.u32 %v1948, 16
        %v1953 = vshrl.u32 %v1948, 16
        %vm1954 = vc.u32 %v1946, %v1950
        %v1955 = vsel %vm1954, 1, 0
        %v1956 = vadd.s32 %v1946, %v1950
        %v1957 = vadd.s32 %v1949, %v1955
        %vm1958 = vc.u32 %v1956, %v1952
        %v1959 = vsel %vm1958, 1, 0
        %v1960 = vadd.s32 %v1956, %v1952
        %v1961 = vadd.s32 %v1957, %v1959
        %v1962 = vadd.s32 %v1961, %v1951
        %v1963 = vadd.s32 %v1962, %v1953
        %v1964 = vmul.u32 %v1919, %v1910
        %v1965 = vadd.s32 %v1941, %v1960
        %vm1966 = vc.u32 %v1941, %v1960
        %v1967 = vadd.s32 %v1963, 1
        %v1968 = vsel %vm1966, %v1967, %v1963
        %v1969 = vadd.s32 %v1964, %v1968
        %v1970 = vadd.s32 %v1969, 536870912
        %v1971 = vshrl.u32 %v1970, 30
        %v1972 = vshll.u32 %v1971, 30
        %v1973 = vsub.s32 %v1969, %v1972
        %vm1974 = vcmp.lt.s32.totalorder %v1973, 0
        %v1975 = vsub.s32 0, %v1973
        %v1976 = vsel %vm1974, %v1975, %v1973
        %v1977 = vclz %v1976
        %v1978 = vsub.s32 %v1977, 2
        %vm1979 = vcmp.gt.s32.totalorder 0, %v1978
        %v1980 = vsel %vm1979, 0, %v1978
        %v1981 = vsub.s32 32, %v1980
        %v1982 = vshll.u32 %v1973, %v1980
        %v1983 = vshrl.u32 %v1965, %v1981
        %v1984 = vor.u32 %v1982, %v1983
        %v1985 = vsub.s32 4294967266, %v1980
        %v1986 = vadd.s32 %v1985, 127
        %v1987 = vshll.u32 %v1986, 23
        %v1988 = vor.u32 4788187, %v1987
        %v1989 = vand.u32 2147483647, %v1988
        %v1991 = vcvt.s32.f32 %v1984
        %v1992 = vmul.f32 %v1991, %v1989
        %v1993 = vxor.u32 %v1992, 2147483648
        %v1994 = vsel %vm1873, %v1993, %v1992
        %v1995 = vsub.s32 4, %v1971
        %v1996 = vsel %vm1873, %v1995, %v1971
        %v1997 = vsel %vm1872, %v1713, %v1994
        %v1998 = vsel %vm1872, 0, %v1996
        %v1999 = vmul.f32 %v1997, %v1997
        %v2000 = vmul.f32 %v1999, -0.001358992
        %v2001 = vadd.f32 %v2000, 0.041655596
        %v2002 = vmul.f32 %v1999, %v2001
        %v2003 = vadd.f32 %v2002, -0.4999988
        %v2004 = vmul.f32 %v1999, %v2003
        %v2005 = vadd.f32 1.0, %v2004
        %v2006 = vmul.f32 %v1997, %v1997
        %v2007 = vmul.f32 %v2006, -0.00019511016
        %v2008 = vadd.f32 %v2007, 0.008332121
        %v2009 = vmul.f32 %v2006, %v2008
        %v2010 = vadd.f32 %v2009, -0.16666654
        %v2011 = vmul.f32 %v2006, %v2010
        %v2012 = vadd.f32 %v2011, 1.0
        %v2013 = vmul.f32 %v2012, %v1997
        %vm2014 = vweird.f32 %v1713
        %v2015 = vand.u32 %v1998, 3
        %vm2016 = vcmp.lt.s32.totalorder %v2015, 2
        %vm2017 = vcmp.eq.s32.totalorder %v2015, 0
        %v2018 = vxor.u32 %v2013, 2147483648
        %v2019 = vsel %vm2017, %v2005, %v2018
        %vm2020 = vcmp.eq.s32.totalorder %v2015, 2
        %v2021 = vxor.u32 %v2005, 2147483648
        %v2022 = vsel %vm2020, %v2021, %v2013
        %v2023 = vsel %vm2016, %v2019, %v2022
        %v2024 = vsel %vm2014, nan, %v2023
        %s2025 = scalar_lea.vmem %s129, 88 [#allocation4]
        %2026 = vst [vmem:[%s2025] sm:$0xff] %v2024
        %s2027 = sand.u32 %s49, 1
        %s2028 = sand.u32 %s49, 1
        %s2029 = smul.addr %s2028, 96
        %s2030 = scalar_lea.vmem [#allocation4], %s2029
        // Predicated region
        $region29: #{sinusoids_embedding_slab.1} parent=23 // pred_check
          %p2031 = pneg %p59
        $region30: #{sinusoids_embedding_slab.1} parent=23 // pred_check_branch
          %2033 = sbr.rel (%p2031) target = $region32
        $region31: #{sinusoids_embedding_slab.1} parent=23 // pred_region
          %s2034 = smul.addr %s15, 8
          %s2035 = scalar_lea.vmem %s1, %s2034
          // Predicated region
          $region33: #{sinusoids_embedding_slab.1} parent=31 // pred_check
            _
          $region34: #{sinusoids_embedding_slab.1} parent=31 // pred_check_branch
            %2037 = sbr.rel (0) target = $region36
          $region35: #{sinusoids_embedding_slab.1} parent=31 // pred_region
            // Predicated region
            $region37: #{sinusoids_embedding_slab.1} parent=35 // pred_check
              _
            $region38: #{sinusoids_embedding_slab.1} parent=35 // pred_check_branch
              %2039 = sbr.rel (0) target = $region40
            $region39: #{sinusoids_embedding_slab.1} parent=35 // pred_region
              // Predicated region
              $region52: #{sinusoids_embedding_slab.1} parent=39 // pred_check
                _
              $region53: #{sinusoids_embedding_slab.1} parent=39 // pred_check_branch
                %2077 = sbr.rel (0) target = $region55
              $region54: #{sinusoids_embedding_slab.1} parent=39 // pred_region
                loop: start=0, step=1, limit=1
                $region56: #{sinusoids_embedding_slab.1} parent=54 // loop_pre_header
                  _
                $region57: #{sinusoids_embedding_slab.1} parent=54 // loop_header
                  %s2079 = sphi 0, %s2083
                  %p2080 = scmp.ge.s32.totalorder %s2079, 1
                  %s2084 = sphi %s2030, %s2030
                  %s2085 = sphi %s2035, %s2035
                $region58: #{sinusoids_embedding_slab.1} parent=54 // loop_header_branch
                  %2082 = sbr.rel (%p2080) target = $region62
                $region59: #{sinusoids_embedding_slab.1} parent=54 // loop_body
                  %v2086 = vld [vmem:[%s2084] sm:$0xff]
                  %2087 = vst [vmem:[%s2085] sm:$0xff] %v2086
                  %v2088 = vld [vmem:[%s2084 + $0x8] sm:$0xff]
                  %2089 = vst [vmem:[%s2085 + $0x10] sm:$0xff] %v2088
                  %v2090 = vld [vmem:[%s2084 + $0x10] sm:$0xff]
                  %2091 = vst [vmem:[%s2085 + $0x20] sm:$0xff] %v2090
                  %v2092 = vld [vmem:[%s2084 + $0x18] sm:$0xff]
                  %2093 = vst [vmem:[%s2085 + $0x30] sm:$0xff] %v2092
                  %v2094 = vld [vmem:[%s2084 + $0x20] sm:$0xff]
                  %2095 = vst [vmem:[%s2085 + $0x40] sm:$0xff] %v2094
                  %v2096 = vld [vmem:[%s2084 + $0x28] sm:$0xff]
                  %2097 = vst [vmem:[%s2085 + $0x50] sm:$0xff] %v2096
                  %v2098 = vld [vmem:[%s2084 + $0x30] sm:$0xff]
                  %2099 = vst [vmem:[%s2085 + $0x60] sm:$0xff] %v2098
                  %v2100 = vld [vmem:[%s2084 + $0x38] sm:$0xff]
                  %2101 = vst [vmem:[%s2085 + $0x70] sm:$0xff] %v2100
                  %v2102 = vld [vmem:[%s2084 + $0x40] sm:$0xff]
                  %2103 = vst [vmem:[%s2085 + $0x80] sm:$0xff] %v2102
                  %v2104 = vld [vmem:[%s2084 + $0x48] sm:$0xff]
                  %2105 = vst [vmem:[%s2085 + $0x90] sm:$0xff] %v2104
                  %v2106 = vld [vmem:[%s2084 + $0x50] sm:$0xff]
                  %2107 = vst [vmem:[%s2085 + $0xa0] sm:$0xff] %v2106
                  %v2108 = vld [vmem:[%s2084 + $0x58] sm:$0xff]
                  %2109 = vst [vmem:[%s2085 + $0xb0] sm:$0xff] %v2108
                $region60: #{sinusoids_embedding_slab.1} parent=54 // loop_footer
                  %s2083 = sadd.s32 1, %s2079
                $region61: #{sinusoids_embedding_slab.1} parent=54 // loop_footer_branch
                  %2078 = sbr.rel target = $region57
                $region62: #{sinusoids_embedding_slab.1} parent=54 // loop_exit
                  _
              $region55: #{sinusoids_embedding_slab.1} parent=39 // pred_fallthru
                _
              // Predicated region
              $region63: #{sinusoids_embedding_slab.1} parent=39 // pred_check
                _
              $region64: #{sinusoids_embedding_slab.1} parent=39 // pred_check_branch
                %2111 = sbr.rel target = $region66
              $region65: #{sinusoids_embedding_slab.1} parent=39 // pred_region
                _
              $region66: #{sinusoids_embedding_slab.1} parent=39 // pred_fallthru
                _
            $region40: #{sinusoids_embedding_slab.1} parent=35 // pred_fallthru
              _
            // Predicated region
            $region41: #{sinusoids_embedding_slab.1} parent=35 // pred_check
              _
            $region42: #{sinusoids_embedding_slab.1} parent=35 // pred_check_branch
              %2041 = sbr.rel target = $region44
            $region43: #{sinusoids_embedding_slab.1} parent=35 // pred_region
              %s2043 = ssub.s32 256, 1
              loop: start=0, step=1, limit=1
              $region45: #{sinusoids_embedding_slab.1} parent=43 // loop_pre_header
                _
              $region46: #{sinusoids_embedding_slab.1} parent=43 // loop_header
                %s2045 = sphi 0, %s2049
                %p2046 = scmp.ge.s32.totalorder %s2045, 1
                %s2050 = sphi %s2030, %s2030
                %s2051 = sphi %s2035, %s2035
              $region47: #{sinusoids_embedding_slab.1} parent=43 // loop_header_branch
                %2048 = sbr.rel (%p2046) target = $region51
              $region48: #{sinusoids_embedding_slab.1} parent=43 // loop_body
                %v2052 = vld [vmem:[%s2050] sm:%s2043]
                %2053 = vst [vmem:[%s2051] sm:%s2043] %v2052
                %v2054 = vld [vmem:[%s2050 + $0x8] sm:%s2043]
                %2055 = vst [vmem:[%s2051 + $0x10] sm:%s2043] %v2054
                %v2056 = vld [vmem:[%s2050 + $0x10] sm:%s2043]
                %2057 = vst [vmem:[%s2051 + $0x20] sm:%s2043] %v2056
                %v2058 = vld [vmem:[%s2050 + $0x18] sm:%s2043]
                %2059 = vst [vmem:[%s2051 + $0x30] sm:%s2043] %v2058
                %v2060 = vld [vmem:[%s2050 + $0x20] sm:%s2043]
                %2061 = vst [vmem:[%s2051 + $0x40] sm:%s2043] %v2060
                %v2062 = vld [vmem:[%s2050 + $0x28] sm:%s2043]
                %2063 = vst [vmem:[%s2051 + $0x50] sm:%s2043] %v2062
                %v2064 = vld [vmem:[%s2050 + $0x30] sm:%s2043]
                %2065 = vst [vmem:[%s2051 + $0x60] sm:%s2043] %v2064
                %v2066 = vld [vmem:[%s2050 + $0x38] sm:%s2043]
                %2067 = vst [vmem:[%s2051 + $0x70] sm:%s2043] %v2066
                %v2068 = vld [vmem:[%s2050 + $0x40] sm:%s2043]
                %2069 = vst [vmem:[%s2051 + $0x80] sm:%s2043] %v2068
                %v2070 = vld [vmem:[%s2050 + $0x48] sm:%s2043]
                %2071 = vst [vmem:[%s2051 + $0x90] sm:%s2043] %v2070
                %v2072 = vld [vmem:[%s2050 + $0x50] sm:%s2043]
                %2073 = vst [vmem:[%s2051 + $0xa0] sm:%s2043] %v2072
                %v2074 = vld [vmem:[%s2050 + $0x58] sm:%s2043]
                %2075 = vst [vmem:[%s2051 + $0xb0] sm:%s2043] %v2074
              $region49: #{sinusoids_embedding_slab.1} parent=43 // loop_footer
                %s2049 = sadd.s32 1, %s2045
              $region50: #{sinusoids_embedding_slab.1} parent=43 // loop_footer_branch
                %2044 = sbr.rel target = $region46
              $region51: #{sinusoids_embedding_slab.1} parent=43 // loop_exit
                _
            $region44: #{sinusoids_embedding_slab.1} parent=35 // pred_fallthru
              _
          $region36: #{sinusoids_embedding_slab.1} parent=31 // pred_fallthru
            _
          %2112 = vnop
        $region32: #{sinusoids_embedding_slab.1} parent=23 // pred_fallthru
          _
      $region24: #{sinusoids_embedding_slab.1} parent=5 // pred_fallthru
        _
      %p2113 = scmp.le.s32.totalorder 2, %s10
      // Predicated region
      $region67: #{sinusoids_embedding_slab.1} parent=5 // pred_check
        %p2114 = pneg %p2113
      $region68: #{sinusoids_embedding_slab.1} parent=5 // pred_check_branch
        %2116 = sbr.rel (%p2114) target = $region70
      $region69: #{sinusoids_embedding_slab.1} parent=5 // pred_region
        %s2117 = ssub.s32 %s10, 2
        // Predicated region
        $region71: #{sinusoids_embedding_slab.1} parent=69 // pred_check
          %p2118 = pneg %p65
        $region72: #{sinusoids_embedding_slab.1} parent=69 // pred_check_branch
          %2120 = sbr.rel (%p2118) target = $region74
        $region73: #{sinusoids_embedding_slab.1} parent=69 // pred_region
          %s2121 = sand.u32 %s50, 1
          %s2122 = sand.u32 %s50, 1
          %s2123 = smul.addr %s2122, 96
          %s2124 = scalar_lea.vmem [#allocation4], %s2123
        $region74: #{sinusoids_embedding_slab.1} parent=69 // pred_fallthru
          _
      $region70: #{sinusoids_embedding_slab.1} parent=5 // pred_fallthru
        _
    $region6: #{sinusoids_embedding_slab.1} parent=1 // loop_footer
      %s14 = sadd.s32 1, %s10
    $region7: #{sinusoids_embedding_slab.1} parent=1 // loop_footer_branch
      %9 = sbr.rel target = $region3
    $region8: #{sinusoids_embedding_slab.1} parent=1 // loop_exit
      _
    %2125 = vsyncpa [#allocation3], 1
    %s2126 = scalar_lea.sflag [#allocation3], 1
    %2127 = vsyncpa %s2126, 1

</llo_original>
